<compile_context>
chip_gen: v7x
topology: tpu7x:2x2x1
jax: 0.10.0
libtpu: 0.0.40
codegen_flags: <defaults>
</compile_context>

<pallas_src>
import math

import jax
import jax.numpy as jnp
from jax import lax
from jax.experimental import pallas as pl
from jax.experimental.pallas import tpu as pltpu


def _round_up(x, m):
    return ((x + m - 1) // m) * m


def conv_sub_relu(x_nchw, w_oihw, bias, *, stride=1, padding=1):
    """Forward pass matching the PyTorch Model.forward, NCHW in / NCHW out."""
    assert stride == 1, "module uses stride=1"
    N, Cin, H, W = x_nchw.shape
    Cout, _, KH, KW = w_oihw.shape
    p = padding
    Ho = H + 2 * p - KH + 1
    Wo = W + 2 * p - KW + 1

    # ---- static tiling decisions -------------------------------------------
    # Lane-friendly padded output width: multiple of 16 so the in-kernel
    # (TH, Wp, K) -> (TH*Wp, K) reshape is a pure retile (no data movement).
    Wp = _round_up(Wo, 16)
    # Output-row stripe height: ~1024 patch rows per grid step, but keep the
    # grid at >= 2 steps so v7x's two TensorCores both get work.
    TH = max(1, min(max(1, 1024 // Wp), pl.cdiv(Ho, 2)))
    Ho_pad = _round_up(Ho, TH)
    S = Ho_pad // TH                 # grid steps along the output-row axis
    TM = TH * Wp                     # patch rows (= output pixels) per step

    H_in = Ho_pad + KH - 1           # padded input height the kernel may touch
    W_in = Wp + KW - 1               # padded input width the kernel may touch

    K = KH * KW * Cin                # im2col contraction depth (75)
    K_pad = _round_up(K, 128)        # MXU/lane friendly (128)

    # ---- wrapper-side operand prep (tiny, no patch-matrix materialization) --
    x_nhwc = jnp.transpose(x_nchw, (0, 2, 3, 1))            # (N, H, W, Cin)
    x_p = jnp.pad(
        x_nhwc,
        ((0, 0), (p, H_in - H - p), (p, W_in - W - p), (0, 0)),
    ).astype(jnp.bfloat16)                                   # (N, H_in, W_in, Cin)

    # Weight rows in (kh, kw, cin) order, zero-padded to K_pad rows.
    w2d = jnp.transpose(w_oihw, (2, 3, 1, 0)).reshape(K, Cout)
    w2d = jnp.pad(w2d, ((0, K_pad - K), (0, 0))).astype(jnp.bfloat16)
    b2d = bias.reshape(1, Cout).astype(jnp.float32)

    # ---- kernel --------------------------------------------------------------
    def kernel(x_ref, w_ref, b_ref, o_ref, patch_ref):
        # x_ref:     (1, H_in, W_in, Cin)  full padded image (bf16), VMEM resident
        # w_ref:     (K_pad, Cout)         bf16 weight (rows >= K are zero)
        # b_ref:     (1, Cout)             f32 bias
        # o_ref:     (1, TM, Cout)         f32 compact output slab
        # patch_ref: (TH, Wp, K_pad)       bf16 im2col scratch
        h0 = pl.program_id(1) * TH

        # Zero the K-padding columns every step (scratch is uninitialized and
        # weight-row zeros would not neutralize NaN garbage).
        if K_pad > K:
            patch_ref[:, :, K:] = jnp.zeros(
                (TH, Wp, K_pad - K), dtype=patch_ref.dtype)

        # In-kernel im2col: 25 shifted slices of the resident image stripe.
        for kh in range(KH):
            slab = x_ref[0, pl.ds(h0 + kh, TH), :, :]        # (TH, W_in, Cin)
            for kw in range(KW):
                col0 = (kh * KW + kw) * Cin
                patch_ref[:, :, col0:col0 + Cin] = slab[:, kw:kw + Wp, :]

        # Single MXU dot over the whole stripe (K_pad = 128 lanes), f32 accumulate.
        patch = patch_ref[...].reshape(TM, K_pad)            # pure retile
        acc = jnp.dot(patch, w_ref[...],
                      preferred_element_type=jnp.float32) + b_ref[...]

        # Fused epilogue: (x - 0.3) -> relu -> (x - 0.2) -> relu
        v = jnp.maximum(acc - 0.3, 0.0)
        v = jnp.maximum(v - 0.2, 0.0)
        o_ref[0, :, :] = v.astype(o_ref.dtype)

    out_slab = pl.pallas_call(
        kernel,
        out_shape=jax.ShapeDtypeStruct((N, Ho_pad * Wp, Cout), jnp.float32),
        grid=(N, S),
        in_specs=[
            # Full padded image per batch element; constant across the stripe
            # axis, so it is DMA'd only when `n` changes.
            pl.BlockSpec((1, H_in, W_in, Cin), lambda n, s: (n, 0, 0, 0)),
            pl.BlockSpec((K_pad, Cout), lambda n, s: (0, 0)),
            pl.BlockSpec((1, Cout), lambda n, s: (0, 0)),
        ],
        out_specs=pl.BlockSpec((1, TM, Cout), lambda n, s: (n, s, 0)),
        scratch_shapes=[pltpu.VMEM((TH, Wp, K_pad), jnp.bfloat16)],
        compiler_params=pltpu.CompilerParams(
            dimension_semantics=("parallel", "parallel"),
            vmem_limit_bytes=32 * 1024 * 1024,
        ),
    )(x_p, w2d, b2d)

    # Slice the valid region and restore NCHW (tiny wrapper-side relayout).
    out = out_slab.reshape(N, Ho_pad, Wp, Cout)[:, :Ho, :Wo, :]
    return jnp.transpose(out, (0, 3, 1, 2))


def _reference(x_nchw, w_oihw, bias, *, stride=1, padding=1):
    """Pure-JAX f32 reference (lax conv) for correctness checking."""
    v1 = lax.conv_general_dilated(
        x_nchw, w_oihw, window_strides=(stride, stride),
        padding=((padding, padding), (padding, padding)),
        dimension_numbers=("NCHW", "OIHW", "NCHW"),
    ) + bias.reshape(1, -1, 1, 1)
    v3 = jnp.maximum(v1 - 0.3, 0.0)
    return jnp.maximum(v3 - 0.2, 0.0)


if __name__ == "__main__":
    key = jax.random.PRNGKey(0)
    k_x, k_w, k_b = jax.random.split(key, 3)

    # Small shapes consistent with the module: Conv2d(3, 15, 5, stride=1, padding=1)
    N, Cin, H, W = 2, 3, 16, 16
    Cout, KH, KW = 15, 5, 5

    x = jax.random.normal(k_x, (N, Cin, H, W), dtype=jnp.float32)

    # Deterministic PyTorch-style Conv2d init: U(-1/sqrt(fan_in), 1/sqrt(fan_in))
    fan_in = Cin * KH * KW
    bound = 1.0 / math.sqrt(fan_in)
    w = jax.random.uniform(k_w, (Cout, Cin, KH, KW), jnp.float32, -bound, bound)
    b = jax.random.uniform(k_b, (Cout,), jnp.float32, -bound, bound)

    out = conv_sub_relu(x, w, b)
    out = jax.block_until_ready(out)

    ref = _reference(x, w, b)
    assert out.shape == ref.shape, (out.shape, ref.shape)
    # bf16 operands with f32 accumulation -> relaxed tolerance vs f32 reference.
    max_err = float(jnp.max(jnp.abs(out - ref)))
    assert jnp.allclose(out, ref, atol=2e-2, rtol=2e-2), f"mismatch, max_err={max_err}"

    print("KERNEL_OK")
</pallas_src>

<mosaic_0001>
module attributes {stable_mosaic.version = 11 : i64} {
  func.func @kernel(%arg0: i32, %arg1: i32, %arg2: memref<1x18x20x3xbf16, #tpu.memory_space<vmem>>, %arg3: memref<128x15xbf16, #tpu.memory_space<vmem>>, %arg4: memref<1x15xf32, #tpu.memory_space<vmem>>, %arg5: memref<1x112x15xf32, #tpu.memory_space<vmem>>, %arg6: memref<7x16x128xbf16, #tpu.memory_space<vmem>>) attributes {dimension_semantics = [#tpu.dimension_semantics<parallel>, #tpu.dimension_semantics<parallel>], iteration_bounds = array<i64: 2, 2>, scalar_prefetch = 0 : i64, scratch_operands = 1 : i64, tpu.core_type = #tpu.core_type<tc>, window_params = [{transform_indices = @transform_0, window_bounds = array<i64: 1, 18, 20, 3>}, {pipeline_mode = #tpu.pipeline_mode<synchronous>, transform_indices = @transform_1, window_bounds = array<i64: 128, 15>}, {pipeline_mode = #tpu.pipeline_mode<synchronous>, transform_indices = @transform_2, window_bounds = array<i64: 1, 15>}, {transform_indices = @transform_3, window_bounds = array<i64: 1, 112, 15>}]} {
    %c7_i32 = arith.constant 7 : i32
    %0 = arith.muli %arg1, %c7_i32 : i32
    %cst = arith.constant 0.000000e+00 : bf16
    %1 = vector.broadcast %cst : bf16 to vector<7x16x53xbf16>
    %c0 = arith.constant 0 : index
    %c0_0 = arith.constant 0 : index
    %c75 = arith.constant 75 : index
    %2 = vector.load %arg6[%c0, %c0_0, %c75] : memref<7x16x128xbf16, #tpu.memory_space<vmem>>, vector<7x16x53xbf16>
    tpu.vector_store %arg6[%c0, %c0_0, %c75], %1 {strides = array<i32>} : memref<7x16x128xbf16, #tpu.memory_space<vmem>>, vector<7x16x53xbf16>,
    %c0_i32 = arith.constant 0 : i32
    %3 = arith.addi %0, %c0_i32 : i32
    %c0_1 = arith.constant 0 : index
    %4 = arith.index_cast %3 : i32 to index
    %c0_2 = arith.constant 0 : index
    %c0_3 = arith.constant 0 : index
    %5 = vector.load %arg2[%c0_1, %4, %c0_2, %c0_3] : memref<1x18x20x3xbf16, #tpu.memory_space<vmem>>, vector<1x7x20x3xbf16>
    %6 = vector.shape_cast %5 : vector<1x7x20x3xbf16> to vector<7x20x3xbf16>
    %7 = vector.extract_strided_slice %6 {offsets = [0, 0, 0], sizes = [7, 16, 3], strides = [1, 1, 1]} : vector<7x20x3xbf16> to vector<7x16x3xbf16>
    %c0_4 = arith.constant 0 : index
    %c0_5 = arith.constant 0 : index
    %c0_6 = arith.constant 0 : index
    %8 = vector.load %arg6[%c0_4, %c0_5, %c0_6] : memref<7x16x128xbf16, #tpu.memory_space<vmem>>, vector<7x16x3xbf16>
    tpu.vector_store %arg6[%c0_4, %c0_5, %c0_6], %7 {strides = array<i32>} : memref<7x16x128xbf16, #tpu.memory_space<vmem>>, vector<7x16x3xbf16>,
    %9 = vector.extract_strided_slice %6 {offsets = [0, 1, 0], sizes = [7, 16, 3], strides = [1, 1, 1]} : vector<7x20x3xbf16> to vector<7x16x3xbf16>
    %c0_7 = arith.constant 0 : index
    %c0_8 = arith.constant 0 : index
    %c3 = arith.constant 3 : index
    %10 = vector.load %arg6[%c0_7, %c0_8, %c3] : memref<7x16x128xbf16, #tpu.memory_space<vmem>>, vector<7x16x3xbf16>
    tpu.vector_store %arg6[%c0_7, %c0_8, %c3], %9 {strides = array<i32>} : memref<7x16x128xbf16, #tpu.memory_space<vmem>>, vector<7x16x3xbf16>,
    %11 = vector.extract_strided_slice %6 {offsets = [0, 2, 0], sizes = [7, 16, 3], strides = [1, 1, 1]} : vector<7x20x3xbf16> to vector<7x16x3xbf16>
    %c0_9 = arith.constant 0 : index
    %c0_10 = arith.constant 0 : index
    %c6 = arith.constant 6 : index
    %12 = vector.load %arg6[%c0_9, %c0_10, %c6] : memref<7x16x128xbf16, #tpu.memory_space<vmem>>, vector<7x16x3xbf16>
    tpu.vector_store %arg6[%c0_9, %c0_10, %c6], %11 {strides = array<i32>} : memref<7x16x128xbf16, #tpu.memory_space<vmem>>, vector<7x16x3xbf16>,
    %13 = vector.extract_strided_slice %6 {offsets = [0, 3, 0], sizes = [7, 16, 3], strides = [1, 1, 1]} : vector<7x20x3xbf16> to vector<7x16x3xbf16>
    %c0_11 = arith.constant 0 : index
    %c0_12 = arith.constant 0 : index
    %c9 = arith.constant 9 : index
    %14 = vector.load %arg6[%c0_11, %c0_12, %c9] : memref<7x16x128xbf16, #tpu.memory_space<vmem>>, vector<7x16x3xbf16>
    tpu.vector_store %arg6[%c0_11, %c0_12, %c9], %13 {strides = array<i32>} : memref<7x16x128xbf16, #tpu.memory_space<vmem>>, vector<7x16x3xbf16>,
    %15 = vector.extract_strided_slice %6 {offsets = [0, 4, 0], sizes = [7, 16, 3], strides = [1, 1, 1]} : vector<7x20x3xbf16> to vector<7x16x3xbf16>
    %c0_13 = arith.constant 0 : index
    %c0_14 = arith.constant 0 : index
    %c12 = arith.constant 12 : index
    %16 = vector.load %arg6[%c0_13, %c0_14, %c12] : memref<7x16x128xbf16, #tpu.memory_space<vmem>>, vector<7x16x3xbf16>
    tpu.vector_store %arg6[%c0_13, %c0_14, %c12], %15 {strides = array<i32>} : memref<7x16x128xbf16, #tpu.memory_space<vmem>>, vector<7x16x3xbf16>,
    %c1_i32 = arith.constant 1 : i32
    %17 = arith.addi %0, %c1_i32 : i32
    %c0_15 = arith.constant 0 : index
    %18 = arith.index_cast %17 : i32 to index
    %c0_16 = arith.constant 0 : index
    %c0_17 = arith.constant 0 : index
    %19 = vector.load %arg2[%c0_15, %18, %c0_16, %c0_17] : memref<1x18x20x3xbf16, #tpu.memory_space<vmem>>, vector<1x7x20x3xbf16>
    %20 = vector.shape_cast %19 : vector<1x7x20x3xbf16> to vector<7x20x3xbf16>
    %21 = vector.extract_strided_slice %20 {offsets = [0, 0, 0], sizes = [7, 16, 3], strides = [1, 1, 1]} : vector<7x20x3xbf16> to vector<7x16x3xbf16>
    %c0_18 = arith.constant 0 : index
    %c0_19 = arith.constant 0 : index
    %c15 = arith.constant 15 : index
    %22 = vector.load %arg6[%c0_18, %c0_19, %c15] : memref<7x16x128xbf16, #tpu.memory_space<vmem>>, vector<7x16x3xbf16>
    tpu.vector_store %arg6[%c0_18, %c0_19, %c15], %21 {strides = array<i32>} : memref<7x16x128xbf16, #tpu.memory_space<vmem>>, vector<7x16x3xbf16>,
    %23 = vector.extract_strided_slice %20 {offsets = [0, 1, 0], sizes = [7, 16, 3], strides = [1, 1, 1]} : vector<7x20x3xbf16> to vector<7x16x3xbf16>
    %c0_20 = arith.constant 0 : index
    %c0_21 = arith.constant 0 : index
    %c18 = arith.constant 18 : index
    %24 = vector.load %arg6[%c0_20, %c0_21, %c18] : memref<7x16x128xbf16, #tpu.memory_space<vmem>>, vector<7x16x3xbf16>
    tpu.vector_store %arg6[%c0_20, %c0_21, %c18], %23 {strides = array<i32>} : memref<7x16x128xbf16, #tpu.memory_space<vmem>>, vector<7x16x3xbf16>,
    %25 = vector.extract_strided_slice %20 {offsets = [0, 2, 0], sizes = [7, 16, 3], strides = [1, 1, 1]} : vector<7x20x3xbf16> to vector<7x16x3xbf16>
    %c0_22 = arith.constant 0 : index
    %c0_23 = arith.constant 0 : index
    %c21 = arith.constant 21 : index
    %26 = vector.load %arg6[%c0_22, %c0_23, %c21] : memref<7x16x128xbf16, #tpu.memory_space<vmem>>, vector<7x16x3xbf16>
    tpu.vector_store %arg6[%c0_22, %c0_23, %c21], %25 {strides = array<i32>} : memref<7x16x128xbf16, #tpu.memory_space<vmem>>, vector<7x16x3xbf16>,
    %27 = vector.extract_strided_slice %20 {offsets = [0, 3, 0], sizes = [7, 16, 3], strides = [1, 1, 1]} : vector<7x20x3xbf16> to vector<7x16x3xbf16>
    %c0_24 = arith.constant 0 : index
    %c0_25 = arith.constant 0 : index
    %c24 = arith.constant 24 : index
    %28 = vector.load %arg6[%c0_24, %c0_25, %c24] : memref<7x16x128xbf16, #tpu.memory_space<vmem>>, vector<7x16x3xbf16>
    tpu.vector_store %arg6[%c0_24, %c0_25, %c24], %27 {strides = array<i32>} : memref<7x16x128xbf16, #tpu.memory_space<vmem>>, vector<7x16x3xbf16>,
    %29 = vector.extract_strided_slice %20 {offsets = [0, 4, 0], sizes = [7, 16, 3], strides = [1, 1, 1]} : vector<7x20x3xbf16> to vector<7x16x3xbf16>
    %c0_26 = arith.constant 0 : index
    %c0_27 = arith.constant 0 : index
    %c27 = arith.constant 27 : index
    %30 = vector.load %arg6[%c0_26, %c0_27, %c27] : memref<7x16x128xbf16, #tpu.memory_space<vmem>>, vector<7x16x3xbf16>
    tpu.vector_store %arg6[%c0_26, %c0_27, %c27], %29 {strides = array<i32>} : memref<7x16x128xbf16, #tpu.memory_space<vmem>>, vector<7x16x3xbf16>,
    %c2_i32 = arith.constant 2 : i32
    %31 = arith.addi %0, %c2_i32 : i32
    %c0_28 = arith.constant 0 : index
    %32 = arith.index_cast %31 : i32 to index
    %c0_29 = arith.constant 0 : index
    %c0_30 = arith.constant 0 : index
    %33 = vector.load %arg2[%c0_28, %32, %c0_29, %c0_30] : memref<1x18x20x3xbf16, #tpu.memory_space<vmem>>, vector<1x7x20x3xbf16>
    %34 = vector.shape_cast %33 : vector<1x7x20x3xbf16> to vector<7x20x3xbf16>
    %35 = vector.extract_strided_slice %34 {offsets = [0, 0, 0], sizes = [7, 16, 3], strides = [1, 1, 1]} : vector<7x20x3xbf16> to vector<7x16x3xbf16>
    %c0_31 = arith.constant 0 : index
    %c0_32 = arith.constant 0 : index
    %c30 = arith.constant 30 : index
    %36 = vector.load %arg6[%c0_31, %c0_32, %c30] : memref<7x16x128xbf16, #tpu.memory_space<vmem>>, vector<7x16x3xbf16>
    tpu.vector_store %arg6[%c0_31, %c0_32, %c30], %35 {strides = array<i32>} : memref<7x16x128xbf16, #tpu.memory_space<vmem>>, vector<7x16x3xbf16>,
    %37 = vector.extract_strided_slice %34 {offsets = [0, 1, 0], sizes = [7, 16, 3], strides = [1, 1, 1]} : vector<7x20x3xbf16> to vector<7x16x3xbf16>
    %c0_33 = arith.constant 0 : index
    %c0_34 = arith.constant 0 : index
    %c33 = arith.constant 33 : index
    %38 = vector.load %arg6[%c0_33, %c0_34, %c33] : memref<7x16x128xbf16, #tpu.memory_space<vmem>>, vector<7x16x3xbf16>
    tpu.vector_store %arg6[%c0_33, %c0_34, %c33], %37 {strides = array<i32>} : memref<7x16x128xbf16, #tpu.memory_space<vmem>>, vector<7x16x3xbf16>,
    %39 = vector.extract_strided_slice %34 {offsets = [0, 2, 0], sizes = [7, 16, 3], strides = [1, 1, 1]} : vector<7x20x3xbf16> to vector<7x16x3xbf16>
    %c0_35 = arith.constant 0 : index
    %c0_36 = arith.constant 0 : index
    %c36 = arith.constant 36 : index
    %40 = vector.load %arg6[%c0_35, %c0_36, %c36] : memref<7x16x128xbf16, #tpu.memory_space<vmem>>, vector<7x16x3xbf16>
    tpu.vector_store %arg6[%c0_35, %c0_36, %c36], %39 {strides = array<i32>} : memref<7x16x128xbf16, #tpu.memory_space<vmem>>, vector<7x16x3xbf16>,
    %41 = vector.extract_strided_slice %34 {offsets = [0, 3, 0], sizes = [7, 16, 3], strides = [1, 1, 1]} : vector<7x20x3xbf16> to vector<7x16x3xbf16>
    %c0_37 = arith.constant 0 : index
    %c0_38 = arith.constant 0 : index
    %c39 = arith.constant 39 : index
    %42 = vector.load %arg6[%c0_37, %c0_38, %c39] : memref<7x16x128xbf16, #tpu.memory_space<vmem>>, vector<7x16x3xbf16>
    tpu.vector_store %arg6[%c0_37, %c0_38, %c39], %41 {strides = array<i32>} : memref<7x16x128xbf16, #tpu.memory_space<vmem>>, vector<7x16x3xbf16>,
    %43 = vector.extract_strided_slice %34 {offsets = [0, 4, 0], sizes = [7, 16, 3], strides = [1, 1, 1]} : vector<7x20x3xbf16> to vector<7x16x3xbf16>
    %c0_39 = arith.constant 0 : index
    %c0_40 = arith.constant 0 : index
    %c42 = arith.constant 42 : index
    %44 = vector.load %arg6[%c0_39, %c0_40, %c42] : memref<7x16x128xbf16, #tpu.memory_space<vmem>>, vector<7x16x3xbf16>
    tpu.vector_store %arg6[%c0_39, %c0_40, %c42], %43 {strides = array<i32>} : memref<7x16x128xbf16, #tpu.memory_space<vmem>>, vector<7x16x3xbf16>,
    %c3_i32 = arith.constant 3 : i32
    %45 = arith.addi %0, %c3_i32 : i32
    %c0_41 = arith.constant 0 : index
    %46 = arith.index_cast %45 : i32 to index
    %c0_42 = arith.constant 0 : index
    %c0_43 = arith.constant 0 : index
    %47 = vector.load %arg2[%c0_41, %46, %c0_42, %c0_43] : memref<1x18x20x3xbf16, #tpu.memory_space<vmem>>, vector<1x7x20x3xbf16>
    %48 = vector.shape_cast %47 : vector<1x7x20x3xbf16> to vector<7x20x3xbf16>
    %49 = vector.extract_strided_slice %48 {offsets = [0, 0, 0], sizes = [7, 16, 3], strides = [1, 1, 1]} : vector<7x20x3xbf16> to vector<7x16x3xbf16>
    %c0_44 = arith.constant 0 : index
    %c0_45 = arith.constant 0 : index
    %c45 = arith.constant 45 : index
    %50 = vector.load %arg6[%c0_44, %c0_45, %c45] : memref<7x16x128xbf16, #tpu.memory_space<vmem>>, vector<7x16x3xbf16>
    tpu.vector_store %arg6[%c0_44, %c0_45, %c45], %49 {strides = array<i32>} : memref<7x16x128xbf16, #tpu.memory_space<vmem>>, vector<7x16x3xbf16>,
    %51 = vector.extract_strided_slice %48 {offsets = [0, 1, 0], sizes = [7, 16, 3], strides = [1, 1, 1]} : vector<7x20x3xbf16> to vector<7x16x3xbf16>
    %c0_46 = arith.constant 0 : index
    %c0_47 = arith.constant 0 : index
    %c48 = arith.constant 48 : index
    %52 = vector.load %arg6[%c0_46, %c0_47, %c48] : memref<7x16x128xbf16, #tpu.memory_space<vmem>>, vector<7x16x3xbf16>
    tpu.vector_store %arg6[%c0_46, %c0_47, %c48], %51 {strides = array<i32>} : memref<7x16x128xbf16, #tpu.memory_space<vmem>>, vector<7x16x3xbf16>,
    %53 = vector.extract_strided_slice %48 {offsets = [0, 2, 0], sizes = [7, 16, 3], strides = [1, 1, 1]} : vector<7x20x3xbf16> to vector<7x16x3xbf16>
    %c0_48 = arith.constant 0 : index
    %c0_49 = arith.constant 0 : index
    %c51 = arith.constant 51 : index
    %54 = vector.load %arg6[%c0_48, %c0_49, %c51] : memref<7x16x128xbf16, #tpu.memory_space<vmem>>, vector<7x16x3xbf16>
    tpu.vector_store %arg6[%c0_48, %c0_49, %c51], %53 {strides = array<i32>} : memref<7x16x128xbf16, #tpu.memory_space<vmem>>, vector<7x16x3xbf16>,
    %55 = vector.extract_strided_slice %48 {offsets = [0, 3, 0], sizes = [7, 16, 3], strides = [1, 1, 1]} : vector<7x20x3xbf16> to vector<7x16x3xbf16>
    %c0_50 = arith.constant 0 : index
    %c0_51 = arith.constant 0 : index
    %c54 = arith.constant 54 : index
    %56 = vector.load %arg6[%c0_50, %c0_51, %c54] : memref<7x16x128xbf16, #tpu.memory_space<vmem>>, vector<7x16x3xbf16>
    tpu.vector_store %arg6[%c0_50, %c0_51, %c54], %55 {strides = array<i32>} : memref<7x16x128xbf16, #tpu.memory_space<vmem>>, vector<7x16x3xbf16>,
    %57 = vector.extract_strided_slice %48 {offsets = [0, 4, 0], sizes = [7, 16, 3], strides = [1, 1, 1]} : vector<7x20x3xbf16> to vector<7x16x3xbf16>
    %c0_52 = arith.constant 0 : index
    %c0_53 = arith.constant 0 : index
    %c57 = arith.constant 57 : index
    %58 = vector.load %arg6[%c0_52, %c0_53, %c57] : memref<7x16x128xbf16, #tpu.memory_space<vmem>>, vector<7x16x3xbf16>
    tpu.vector_store %arg6[%c0_52, %c0_53, %c57], %57 {strides = array<i32>} : memref<7x16x128xbf16, #tpu.memory_space<vmem>>, vector<7x16x3xbf16>,
    %c4_i32 = arith.constant 4 : i32
    %59 = arith.addi %0, %c4_i32 : i32
    %c0_54 = arith.constant 0 : index
    %60 = arith.index_cast %59 : i32 to index
    %c0_55 = arith.constant 0 : index
    %c0_56 = arith.constant 0 : index
    %61 = vector.load %arg2[%c0_54, %60, %c0_55, %c0_56] : memref<1x18x20x3xbf16, #tpu.memory_space<vmem>>, vector<1x7x20x3xbf16>
    %62 = vector.shape_cast %61 : vector<1x7x20x3xbf16> to vector<7x20x3xbf16>
    %63 = vector.extract_strided_slice %62 {offsets = [0, 0, 0], sizes = [7, 16, 3], strides = [1, 1, 1]} : vector<7x20x3xbf16> to vector<7x16x3xbf16>
    %c0_57 = arith.constant 0 : index
    %c0_58 = arith.constant 0 : index
    %c60 = arith.constant 60 : index
    %64 = vector.load %arg6[%c0_57, %c0_58, %c60] : memref<7x16x128xbf16, #tpu.memory_space<vmem>>, vector<7x16x3xbf16>
    tpu.vector_store %arg6[%c0_57, %c0_58, %c60], %63 {strides = array<i32>} : memref<7x16x128xbf16, #tpu.memory_space<vmem>>, vector<7x16x3xbf16>,
    %65 = vector.extract_strided_slice %62 {offsets = [0, 1, 0], sizes = [7, 16, 3], strides = [1, 1, 1]} : vector<7x20x3xbf16> to vector<7x16x3xbf16>
    %c0_59 = arith.constant 0 : index
    %c0_60 = arith.constant 0 : index
    %c63 = arith.constant 63 : index
    %66 = vector.load %arg6[%c0_59, %c0_60, %c63] : memref<7x16x128xbf16, #tpu.memory_space<vmem>>, vector<7x16x3xbf16>
    tpu.vector_store %arg6[%c0_59, %c0_60, %c63], %65 {strides = array<i32>} : memref<7x16x128xbf16, #tpu.memory_space<vmem>>, vector<7x16x3xbf16>,
    %67 = vector.extract_strided_slice %62 {offsets = [0, 2, 0], sizes = [7, 16, 3], strides = [1, 1, 1]} : vector<7x20x3xbf16> to vector<7x16x3xbf16>
    %c0_61 = arith.constant 0 : index
    %c0_62 = arith.constant 0 : index
    %c66 = arith.constant 66 : index
    %68 = vector.load %arg6[%c0_61, %c0_62, %c66] : memref<7x16x128xbf16, #tpu.memory_space<vmem>>, vector<7x16x3xbf16>
    tpu.vector_store %arg6[%c0_61, %c0_62, %c66], %67 {strides = array<i32>} : memref<7x16x128xbf16, #tpu.memory_space<vmem>>, vector<7x16x3xbf16>,
    %69 = vector.extract_strided_slice %62 {offsets = [0, 3, 0], sizes = [7, 16, 3], strides = [1, 1, 1]} : vector<7x20x3xbf16> to vector<7x16x3xbf16>
    %c0_63 = arith.constant 0 : index
    %c0_64 = arith.constant 0 : index
    %c69 = arith.constant 69 : index
    %70 = vector.load %arg6[%c0_63, %c0_64, %c69] : memref<7x16x128xbf16, #tpu.memory_space<vmem>>, vector<7x16x3xbf16>
    tpu.vector_store %arg6[%c0_63, %c0_64, %c69], %69 {strides = array<i32>} : memref<7x16x128xbf16, #tpu.memory_space<vmem>>, vector<7x16x3xbf16>,
    %71 = vector.extract_strided_slice %62 {offsets = [0, 4, 0], sizes = [7, 16, 3], strides = [1, 1, 1]} : vector<7x20x3xbf16> to vector<7x16x3xbf16>
    %c0_65 = arith.constant 0 : index
    %c0_66 = arith.constant 0 : index
    %c72 = arith.constant 72 : index
    %72 = vector.load %arg6[%c0_65, %c0_66, %c72] : memref<7x16x128xbf16, #tpu.memory_space<vmem>>, vector<7x16x3xbf16>
    tpu.vector_store %arg6[%c0_65, %c0_66, %c72], %71 {strides = array<i32>} : memref<7x16x128xbf16, #tpu.memory_space<vmem>>, vector<7x16x3xbf16>,
    %c0_67 = arith.constant 0 : index
    %c0_68 = arith.constant 0 : index
    %c0_69 = arith.constant 0 : index
    %73 = vector.load %arg6[%c0_67, %c0_68, %c0_69] : memref<7x16x128xbf16, #tpu.memory_space<vmem>>, vector<7x16x128xbf16>
    %74 = vector.shape_cast %73 : vector<7x16x128xbf16> to vector<112x128xbf16>
    %c0_70 = arith.constant 0 : index
    %c0_71 = arith.constant 0 : index
    %75 = vector.load %arg3[%c0_70, %c0_71] : memref<128x15xbf16, #tpu.memory_space<vmem>>, vector<128x15xbf16>
    %cst_72 = arith.constant dense<0.000000e+00> : vector<112x15xf32>
    %76 = tpu.matmul %74, %75, %cst_72 {dimension_numbers = #tpu.dot_dimension_numbers<[1], [0], [0], [1], [0, 0, 1, 1], [], []>} : vector<112x128xbf16>, vector<128x15xbf16>, vector<112x15xf32> -> vector<112x15xf32>
    %c0_73 = arith.constant 0 : index
    %c0_74 = arith.constant 0 : index
    %77 = vector.load %arg4[%c0_73, %c0_74] : memref<1x15xf32, #tpu.memory_space<vmem>>, vector<1x15xf32>
    %78 = vector.broadcast %77 : vector<1x15xf32> to vector<112x15xf32>
    %79 = arith.addf %76, %78 : vector<112x15xf32>
    %cst_75 = arith.constant 3.000000e-01 : f32
    %80 = vector.broadcast %cst_75 : f32 to vector<112x15xf32>
    %81 = arith.subf %79, %80 : vector<112x15xf32>
    %cst_76 = arith.constant 0.000000e+00 : f32
    %82 = vector.broadcast %cst_76 : f32 to vector<112x15xf32>
    %83 = arith.maximumf %81, %82 : vector<112x15xf32>
    %cst_77 = arith.constant 2.000000e-01 : f32
    %84 = vector.broadcast %cst_77 : f32 to vector<112x15xf32>
    %85 = arith.subf %83, %84 : vector<112x15xf32>
    %cst_78 = arith.constant 0.000000e+00 : f32
    %86 = vector.broadcast %cst_78 : f32 to vector<112x15xf32>
    %87 = arith.maximumf %85, %86 : vector<112x15xf32>
    %c0_79 = arith.constant 0 : index
    %c0_80 = arith.constant 0 : index
    %c0_81 = arith.constant 0 : index
    %88 = vector.load %arg5[%c0_79, %c0_80, %c0_81] : memref<1x112x15xf32, #tpu.memory_space<vmem>>, vector<1x112x15xf32>
    %89 = vector.shape_cast %88 : vector<1x112x15xf32> to vector<112x15xf32>
    %90 = vector.shape_cast %87 : vector<112x15xf32> to vector<1x112x15xf32>
    tpu.vector_store %arg5[%c0_79, %c0_80, %c0_81], %90 {strides = array<i32>} : memref<1x112x15xf32, #tpu.memory_space<vmem>>, vector<1x112x15xf32>,
    return
  }
  func.func @transform_0(%arg0: i32, %arg1: i32) -> (i32, i32, i32, i32) {
    %c0_i32 = arith.constant 0 : i32
    %c0_i32_0 = arith.constant 0 : i32
    %c0_i32_1 = arith.constant 0 : i32
    %c0_i32_2 = arith.constant 0 : i32
    return %arg0, %c0_i32, %c0_i32_0, %c0_i32_1 : i32, i32, i32, i32
  }
  func.func @transform_1(%arg0: i32, %arg1: i32) -> (i32, i32) {
    %c0_i32 = arith.constant 0 : i32
    %c0_i32_0 = arith.constant 0 : i32
    %c0_i32_1 = arith.constant 0 : i32
    return %c0_i32, %c0_i32_0 : i32, i32
  }
  func.func @transform_2(%arg0: i32, %arg1: i32) -> (i32, i32) {
    %c0_i32 = arith.constant 0 : i32
    %c0_i32_0 = arith.constant 0 : i32
    %c0_i32_1 = arith.constant 0 : i32
    return %c0_i32, %c0_i32_0 : i32, i32
  }
  func.func @transform_3(%arg0: i32, %arg1: i32) -> (i32, i32, i32) {
    %c0_i32 = arith.constant 0 : i32
    %c0_i32_0 = arith.constant 0 : i32
    return %arg0, %arg1, %c0_i32 : i32, i32, i32
  }
}

</mosaic_0001>

<llo_original>
// kernel: tpu_custom_call.1
$region0: #{tpu_custom_call.1}
  #allocation0 [shape = 'u32[]', space=smem, size = 0x4, offset = 0x4, fixed_abs, tag = 'smem constant byte address 0x4 - core index']
  #allocation1 [shape = 'u32[144,128]{1,0:T(1,128)}', space=vmem, size = 0x12000, scoped, tag = 'internal scratch']
  #allocation2 [shape = 'bf16[7,16,128]{2,1,0:T(16,128)(2,1)}', space=vmem, size = 0x7000, scoped, tag = 'scratch operand']
  %s0 = inlined_call_operand.vmem [shape: bf16[2,18,20,3], index: 0, kind: input, shape index: {}]
  %s1 = inlined_call_operand.vmem [shape: bf16[128,15], index: 1, kind: input, shape index: {}]
  %s2 = inlined_call_operand.vmem [shape: f32[1,15], index: 2, kind: input, shape index: {}]
  %s3 = inlined_call_operand.vmem [shape: f32[2,224,15], index: 3, kind: output, shape index: {}]
  %s4 = sld [smem:[#allocation0]]
  $region45: #{tpu_custom_call.1} parent=0
    _
  %s6 = ssub.s32 1, %s4
  %s7 = scalar_select 0, %s6, %s4
  loop: start=0, step=1, limit=6
  $region2: #{tpu_custom_call.1} parent=0 // loop_pre_header
    _
  $region3: #{tpu_custom_call.1} parent=0 // loop_header
    %s9 = sphi 0, %s13
    %p10 = scmp.ge.s32.totalorder %s9, 6
    %s16 = sphi 0, %s28
    %s17 = sphi 0, %s24
    %s18 = sphi 0, %s16
    %s19 = sphi 0, %s17
    %s20 = sphi 0, %s18
    %s21 = sphi 0, %s19
    %s31 = sphi 0, %s33
    %s34 = sphi 0, %s31
    %s35 = sphi 0, %s34
    %s51 = sphi 0, %s35
    %s55 = sphi 0, %s55
    %s57 = sphi 0, %s55
    %s58 = sphi 0, %s57
    %s72 = sphi 0, %s58
    %s76 = sphi 0, %s76
    %s78 = sphi 0, %s76
    %s79 = sphi 0, %s78
    %s93 = sphi 0, %s79
    %s101 = sphi 0, %s103
    %s104 = sphi 0, %s101
    %s105 = sphi 0, %s104
    %s121 = sphi 0, %s105
  $region4: #{tpu_custom_call.1} parent=0 // loop_header_branch
    %12 = sbr.rel (%p10) target = $region8
  $region5: #{tpu_custom_call.1} parent=0 // loop_body
    %s14 = ssub.s32 %s9, 1
    %s15 = ssub.s32 %s9, 2
    %s22 = sadd.s32 1, %s17
    %p23 = scmp.ge.s32.totalorder %s22, 2
    %s24 = scalar_select %p23, 0, %s22
    %s25 = sadd.s32 1, %s16
    %s26 = scalar_select %p23, %s25, %s16
    %p27 = scmp.ge.s32.totalorder %s26, 2
    %s28 = scalar_select %p27, 0, %s26
    %s29 = ssub.s32 %s16, %s28
    %p30 = scmp.eq.s32.totalorder %s29, 0
    %s32 = sadd.s32 %s31, 1
    %s33 = scalar_select %p30, %s31, %s32
    %p36 = pneg %p30
    %p37 = scmp.eq.s32.totalorder %s9, 3
    %p38 = por %p36, %p37
    %p39 = scmp.ne.s32.totalorder %s31, %s34
    %p40 = scmp.eq.s32.totalorder %s9, 0
    %p41 = por %p39, %p40
    %p42 = scmp.ne.s32.totalorder %s31, %s34
    %p43 = scmp.eq.s32.totalorder %s14, 3
    %p44 = por %p42, %p43
    %p45 = scmp.ne.s32.totalorder %s34, %s35
    %p46 = scmp.eq.s32.totalorder %s14, 0
    %p47 = por %p45, %p46
    %p48 = scmp.ne.s32.totalorder %s34, %s35
    %p49 = scmp.eq.s32.totalorder %s15, 3
    %p50 = por %p48, %p49
    %p52 = scmp.ne.s32.totalorder %s35, %s51
    %p53 = scmp.eq.s32.totalorder %s15, 0
    %p54 = por %p52, %p53
    %s56 = sadd.s32 %s55, 1
    %p59 = scmp.eq.s32.totalorder %s9, 3
    %p60 = scmp.ne.s32.totalorder %s55, %s57
    %p61 = scmp.eq.s32.totalorder %s9, 0
    %p62 = por %p60, %p61
    %p63 = scmp.ne.s32.totalorder %s55, %s57
    %p64 = scmp.eq.s32.totalorder %s14, 3
    %p65 = por %p63, %p64
    %p66 = scmp.ne.s32.totalorder %s57, %s58
    %p67 = scmp.eq.s32.totalorder %s14, 0
    %p68 = por %p66, %p67
    %p69 = scmp.ne.s32.totalorder %s57, %s58
    %p70 = scmp.eq.s32.totalorder %s15, 3
    %p71 = por %p69, %p70
    %p73 = scmp.ne.s32.totalorder %s58, %s72
    %p74 = scmp.eq.s32.totalorder %s15, 0
    %p75 = por %p73, %p74
    %s77 = sadd.s32 %s76, 1
    %p80 = scmp.eq.s32.totalorder %s9, 3
    %p81 = scmp.ne.s32.totalorder %s76, %s78
    %p82 = scmp.eq.s32.totalorder %s9, 0
    %p83 = por %p81, %p82
    %p84 = scmp.ne.s32.totalorder %s76, %s78
    %p85 = scmp.eq.s32.totalorder %s14, 3
    %p86 = por %p84, %p85
    %p87 = scmp.ne.s32.totalorder %s78, %s79
    %p88 = scmp.eq.s32.totalorder %s14, 0
    %p89 = por %p87, %p88
    %p90 = scmp.ne.s32.totalorder %s78, %s79
    %p91 = scmp.eq.s32.totalorder %s15, 3
    %p92 = por %p90, %p91
    %p94 = scmp.ne.s32.totalorder %s79, %s93
    %p95 = scmp.eq.s32.totalorder %s15, 0
    %p96 = por %p94, %p95
    %s97 = ssub.s32 %s16, %s28
    %s98 = ssub.s32 %s17, %s24
    %s99 = sor.u32 %s97, %s98
    %p100 = scmp.eq.s32.totalorder %s99, 0
    %s102 = sadd.s32 %s101, 1
    %s103 = scalar_select %p100, %s101, %s102
    %p106 = pneg %p100
    %p107 = scmp.eq.s32.totalorder %s9, 3
    %p108 = por %p106, %p107
    %p109 = scmp.ne.s32.totalorder %s101, %s104
    %p110 = scmp.eq.s32.totalorder %s9, 0
    %p111 = por %p109, %p110
    %p112 = scmp.ne.s32.totalorder %s101, %s104
    %p113 = scmp.eq.s32.totalorder %s14, 3
    %p114 = por %p112, %p113
    %p115 = scmp.ne.s32.totalorder %s104, %s105
    %p116 = scmp.eq.s32.totalorder %s14, 0
    %p117 = por %p115, %p116
    %p118 = scmp.ne.s32.totalorder %s104, %s105
    %p119 = scmp.eq.s32.totalorder %s15, 3
    %p120 = por %p118, %p119
    %p122 = scmp.ne.s32.totalorder %s105, %s121
    %p123 = scmp.eq.s32.totalorder %s15, 0
    %p124 = por %p122, %p123
    %p125 = scmp.le.s32.totalorder 1, %s9
    %p126 = scmp.lt.s32.totalorder %s9, 5
    %p127 = pnand %p125, %p126
    %p128 = pneg %p127
    // Predicated region
    $region9: #{tpu_custom_call.1} parent=5 // pred_check
      _
    $region10: #{tpu_custom_call.1} parent=5 // pred_check_branch
      %130 = sbr.rel (%p127) target = $region12
    $region11: #{tpu_custom_call.1} parent=5 // pred_region
      %s131 = ssub.s32 %s9, 1
      // Predicated region
      $region13: #{tpu_custom_call.1} parent=11 // pred_check
        %p132 = pneg %p68
      $region14: #{tpu_custom_call.1} parent=11 // pred_check_branch
        %134 = sbr.rel (%p132) target = $region16
      $region15: #{tpu_custom_call.1} parent=11 // pred_region
        _
      $region16: #{tpu_custom_call.1} parent=11 // pred_fallthru
        _
      // Predicated region
      $region17: #{tpu_custom_call.1} parent=11 // pred_check
        %p135 = pneg %p89
      $region18: #{tpu_custom_call.1} parent=11 // pred_check_branch
        %137 = sbr.rel (%p135) target = $region20
      $region19: #{tpu_custom_call.1} parent=11 // pred_region
        _
      $region20: #{tpu_custom_call.1} parent=11 // pred_fallthru
        _
    $region12: #{tpu_custom_call.1} parent=5 // pred_fallthru
      _
    %p138 = scmp.lt.s32.totalorder %s9, 4
    // Predicated region
    $region21: #{tpu_custom_call.1} parent=5 // pred_check
      %p139 = pneg %p138
    $region22: #{tpu_custom_call.1} parent=5 // pred_check_branch
      %141 = sbr.rel (%p139) target = $region24
    $region23: #{tpu_custom_call.1} parent=5 // pred_region
      // Predicated region
      $region25: #{tpu_custom_call.1} parent=23 // pred_check
        %p142 = pneg %p41
      $region26: #{tpu_custom_call.1} parent=23 // pred_check_branch
        %144 = sbr.rel (%p142) target = $region28
      $region27: #{tpu_custom_call.1} parent=23 // pred_region
        %p145 = scmp.lt.s32.totalorder %s16, 1
        %s146 = scalar_select %p145, %s16, 1
        %s147 = smul.addr %s146, 54
        %s148 = smul.addr %s147, 4
        %s149 = scalar_lea.vmem %s0, %s148
      $region28: #{tpu_custom_call.1} parent=23 // pred_fallthru
        _
    $region24: #{tpu_custom_call.1} parent=5 // pred_fallthru
      _
    %p150 = scmp.le.s32.totalorder 1, %s9
    %p151 = scmp.lt.s32.totalorder %s9, 5
    %p152 = pnand %p150, %p151
    %p153 = pneg %p152
    // Predicated region
    $region29: #{tpu_custom_call.1} parent=5 // pred_check
      _
    $region30: #{tpu_custom_call.1} parent=5 // pred_check_branch
      %155 = sbr.rel (%p152) target = $region32
    $region31: #{tpu_custom_call.1} parent=5 // pred_region
      %s156 = ssub.s32 %s9, 1
      %p157 = scmp.lt.s32.totalorder %s18, 1
      %s158 = scalar_select %p157, %s18, 1
      %s159 = smul.addr %s158, 54
      %s160 = smul.addr %s159, 4
      %s161 = scalar_lea.vmem %s0, %s160
      %p162 = pneg %p47
      %p163 = pneg %p44
      %p164 = pneg %p68
      %p165 = pneg %p65
      %p166 = pneg %p89
      %p167 = pneg %p86
      %p168 = pneg %p117
      %p169 = pneg %p114
      %s170 = smul.u32 14, %s19
      %p171 = scmp.lt.s32.totalorder %s18, 1
      %s172 = scalar_select %p171, %s18, 1
      %p173 = scmp.lt.s32.totalorder %s170, 27
      %s174 = scalar_select %p173, %s170, 27
      %s175 = smul.addr %s172, 28
      %s176 = sadd.s32 %s174, %s175
      %s177 = smul.addr %s176, 8
      %s178 = scalar_lea.vmem %s3, %s177
      %p179 = scmp.lt.s32.totalorder %s18, 1
      %s180 = scalar_select %p179, %s18, 1
      %s181 = smul.addr %s180, 54
      %s182 = smul.addr %s181, 4
      %s183 = scalar_lea.vmem %s0, %s182
      %s184 = smul.u32 14, %s19
      %p185 = scmp.lt.s32.totalorder %s18, 1
      %s186 = scalar_select %p185, %s18, 1
      %p187 = scmp.lt.s32.totalorder %s184, 27
      %s188 = scalar_select %p187, %s184, 27
      %s189 = smul.addr %s186, 28
      %s190 = sadd.s32 %s188, %s189
      %s191 = smul.addr %s190, 8
      %s192 = scalar_lea.vmem %s3, %s191
      %s193 = smul.u32 14, %s19
      %s195 = smul.u32 %s19, 7
      %vm196 = vcmask 1048152
      %197 = vst.msk [vmem:[#allocation2] sm:$0xff] %vm196, 0
      %198 = vst.msk [vmem:[#allocation2 + $0x8] sm:$0xff] %vm196, 0
      %199 = vst.msk [vmem:[#allocation2 + $0x10] sm:$0xff] %vm196, 0
      %200 = vst.msk [vmem:[#allocation2 + $0x18] sm:$0xff] %vm196, 0
      %201 = vst.msk [vmem:[#allocation2 + $0x20] sm:$0xff] %vm196, 0
      %202 = vst.msk [vmem:[#allocation2 + $0x28] sm:$0xff] %vm196, 0
      %203 = vst.msk [vmem:[#allocation2 + $0x30] sm:$0xff] %vm196, 0
      %s204 = smul.u32 %s195, 3
      %s205 = smul.addr %s204, 4
      %s206 = scalar_lea.vmem %s183, %s205
      %v207 = vld [vmem:[%s206] sm:$0xf]
      %v208 = vld [vmem:[%s206 + $0x4] sm:$0xf]
      %v209 = vld [vmem:[%s206 + $0x8] sm:$0x3]
      %v210 = vld [vmem:[%s206 + $0xc] sm:$0xf]
      %v211 = vld [vmem:[%s206 + $0x10] sm:$0xf]
      %v212 = vld [vmem:[%s206 + $0x14] sm:$0x3]
      %v213 = vld [vmem:[%s206 + $0x18] sm:$0xf]
      %v214 = vld [vmem:[%s206 + $0x1c] sm:$0xf]
      %v215 = vld [vmem:[%s206 + $0x20] sm:$0x3]
      %v216 = vld [vmem:[%s206 + $0x24] sm:$0xf]
      %v217 = vld [vmem:[%s206 + $0x28] sm:$0xf]
      %v218 = vld [vmem:[%s206 + $0x2c] sm:$0x3]
      %v219 = vld [vmem:[%s206 + $0x30] sm:$0xf]
      %v220 = vld [vmem:[%s206 + $0x34] sm:$0xf]
      %v221 = vld [vmem:[%s206 + $0x38] sm:$0x3]
      %v222 = vld [vmem:[%s206 + $0x3c] sm:$0xf]
      %v223 = vld [vmem:[%s206 + $0x40] sm:$0xf]
      %v224 = vld [vmem:[%s206 + $0x44] sm:$0x3]
      %v225 = vld [vmem:[%s206 + $0x48] sm:$0xf]
      %v226 = vld [vmem:[%s206 + $0x4c] sm:$0xf]
      %v227 = vld [vmem:[%s206 + $0x50] sm:$0x3]
      %v242 = vunpack.c.l.b16 %v207
      %v243 = vunpack.c.l.b16 %v208
      %v244 = vunpack.c.l.b16 %v210
      %v245 = vunpack.c.l.b16 %v211
      %v246 = vunpack.c.l.b16 %v213
      %v247 = vunpack.c.l.b16 %v214
      %v248 = vunpack.c.l.b16 %v216
      %v249 = vunpack.c.l.b16 %v217
      %v250 = vunpack.c.l.b16 %v219
      %v251 = vunpack.c.l.b16 %v220
      %v252 = vunpack.c.l.b16 %v222
      %v253 = vunpack.c.l.b16 %v223
      %v254 = vunpack.c.l.b16 %v225
      %v255 = vunpack.c.l.b16 %v226
      %v256 = vpack.c.b16 %v243, %v242
      %v257 = vpack.c.b16 %v245, %v244
      %v258 = vpack.c.b16 %v247, %v246
      %v259 = vpack.c.b16 %v249, %v248
      %v260 = vpack.c.b16 %v251, %v250
      %v261 = vpack.c.b16 %v253, %v252
      %v262 = vpack.c.b16 %v255, %v254
      %vm270 = vcmask 23552
      %271 = vst.msk [vmem:[#allocation2] sm:$0xff] %vm270, %v256
      %272 = vst.msk [vmem:[#allocation2 + $0x8] sm:$0xff] %vm270, %v257
      %273 = vst.msk [vmem:[#allocation2 + $0x10] sm:$0xff] %vm270, %v258
      %274 = vst.msk [vmem:[#allocation2 + $0x18] sm:$0xff] %vm270, %v259
      %275 = vst.msk [vmem:[#allocation2 + $0x20] sm:$0xff] %vm270, %v260
      %276 = vst.msk [vmem:[#allocation2 + $0x28] sm:$0xff] %vm270, %v261
      %277 = vst.msk [vmem:[#allocation2 + $0x30] sm:$0xff] %vm270, %v262
      %v285 = vunpack.c.l.b16 %v209
      %v286 = vunpack.c.l.b16 %v212
      %v287 = vunpack.c.l.b16 %v215
      %v288 = vunpack.c.l.b16 %v218
      %v289 = vunpack.c.l.b16 %v221
      %v290 = vunpack.c.l.b16 %v224
      %v291 = vunpack.c.l.b16 %v227
      %v292 = vpack.c.b16 %v285, %v285
      %v293 = vpack.c.b16 %v286, %v286
      %v294 = vpack.c.b16 %v287, %v287
      %v295 = vpack.c.b16 %v288, %v288
      %v296 = vpack.c.b16 %v289, %v289
      %v297 = vpack.c.b16 %v290, %v290
      %v298 = vpack.c.b16 %v291, %v291
      %vm299 = vsmask.f32 7424
      %v301 = vshrl.u32 %v256, 16
      %v303 = vshll.u32 %v256, 16
      %v305 = vrot.slane %v303, 1
      %v306 = vor.u32 %v301, %v305
      %v308 = vshll.u32 %v292, 16
      %v310 = vrot.slane %v308, 1
      %v311 = vsel %vm299, %v306, %v310
      %v313 = vshrl.u32 %v257, 16
      %v315 = vshll.u32 %v257, 16
      %v317 = vrot.slane %v315, 1
      %v318 = vor.u32 %v313, %v317
      %v320 = vshll.u32 %v293, 16
      %v322 = vrot.slane %v320, 1
      %v323 = vsel %vm299, %v318, %v322
      %v325 = vshrl.u32 %v258, 16
      %v327 = vshll.u32 %v258, 16
      %v329 = vrot.slane %v327, 1
      %v330 = vor.u32 %v325, %v329
      %v332 = vshll.u32 %v294, 16
      %v334 = vrot.slane %v332, 1
      %v335 = vsel %vm299, %v330, %v334
      %v337 = vshrl.u32 %v259, 16
      %v339 = vshll.u32 %v259, 16
      %v341 = vrot.slane %v339, 1
      %v342 = vor.u32 %v337, %v341
      %v344 = vshll.u32 %v295, 16
      %v346 = vrot.slane %v344, 1
      %v347 = vsel %vm299, %v342, %v346
      %v349 = vshrl.u32 %v260, 16
      %v351 = vshll.u32 %v260, 16
      %v353 = vrot.slane %v351, 1
      %v354 = vor.u32 %v349, %v353
      %v356 = vshll.u32 %v296, 16
      %v358 = vrot.slane %v356, 1
      %v359 = vsel %vm299, %v354, %v358
      %v361 = vshrl.u32 %v261, 16
      %v363 = vshll.u32 %v261, 16
      %v365 = vrot.slane %v363, 1
      %v366 = vor.u32 %v361, %v365
      %v368 = vshll.u32 %v297, 16
      %v370 = vrot.slane %v368, 1
      %v371 = vsel %vm299, %v366, %v370
      %v373 = vshrl.u32 %v262, 16
      %v375 = vshll.u32 %v262, 16
      %v377 = vrot.slane %v375, 1
      %v378 = vor.u32 %v373, %v377
      %v380 = vshll.u32 %v298, 16
      %v382 = vrot.slane %v380, 1
      %v383 = vsel %vm299, %v378, %v382
      %384 = vrot.lane.b32.xlu0 %v311, 3
      %v385 = vpop.permute.xlu0 %384
      %386 = vrot.lane.b32.xlu0 %v323, 3
      %v387 = vpop.permute.xlu0 %386
      %388 = vrot.lane.b32.xlu0 %v335, 3
      %v389 = vpop.permute.xlu0 %388
      %390 = vrot.lane.b32.xlu0 %v347, 3
      %v391 = vpop.permute.xlu0 %390
      %392 = vrot.lane.b32.xlu0 %v359, 3
      %v393 = vpop.permute.xlu0 %392
      %394 = vrot.lane.b32.xlu0 %v371, 3
      %v395 = vpop.permute.xlu0 %394
      %396 = vrot.lane.b32.xlu0 %v383, 3
      %v397 = vpop.permute.xlu0 %396
      %vm405 = vcmask 48152
      %406 = vst.msk [vmem:[#allocation2] sm:$0xff] %vm405, %v385
      %407 = vst.msk [vmem:[#allocation2 + $0x8] sm:$0xff] %vm405, %v387
      %408 = vst.msk [vmem:[#allocation2 + $0x10] sm:$0xff] %vm405, %v389
      %409 = vst.msk [vmem:[#allocation2 + $0x18] sm:$0xff] %vm405, %v391
      %410 = vst.msk [vmem:[#allocation2 + $0x20] sm:$0xff] %vm405, %v393
      %411 = vst.msk [vmem:[#allocation2 + $0x28] sm:$0xff] %vm405, %v395
      %412 = vst.msk [vmem:[#allocation2 + $0x30] sm:$0xff] %vm405, %v397
      %vm413 = vcmask 1046528
      %v414 = vrot.slane %v256, 1
      %v415 = vrot.slane %v292, 1
      %v416 = vsel %vm413, %v414, %v415
      %v417 = vrot.slane %v257, 1
      %v418 = vrot.slane %v293, 1
      %v419 = vsel %vm413, %v417, %v418
      %v420 = vrot.slane %v258, 1
      %v421 = vrot.slane %v294, 1
      %v422 = vsel %vm413, %v420, %v421
      %v423 = vrot.slane %v259, 1
      %v424 = vrot.slane %v295, 1
      %v425 = vsel %vm413, %v423, %v424
      %v426 = vrot.slane %v260, 1
      %v427 = vrot.slane %v296, 1
      %v428 = vsel %vm413, %v426, %v427
      %v429 = vrot.slane %v261, 1
      %v430 = vrot.slane %v297, 1
      %v431 = vsel %vm413, %v429, %v430
      %v432 = vrot.slane %v262, 1
      %v433 = vrot.slane %v298, 1
      %v434 = vsel %vm413, %v432, %v433
      %435 = vrot.lane.b32.xlu0 %v416, 6
      %v436 = vpop.permute.xlu0 %435
      %437 = vrot.lane.b32.xlu0 %v419, 6
      %v438 = vpop.permute.xlu0 %437
      %439 = vrot.lane.b32.xlu0 %v422, 6
      %v440 = vpop.permute.xlu0 %439
      %441 = vrot.lane.b32.xlu0 %v425, 6
      %v442 = vpop.permute.xlu0 %441
      %443 = vrot.lane.b32.xlu0 %v428, 6
      %v444 = vpop.permute.xlu0 %443
      %445 = vrot.lane.b32.xlu0 %v431, 6
      %v446 = vpop.permute.xlu0 %445
      %447 = vrot.lane.b32.xlu0 %v434, 6
      %v448 = vpop.permute.xlu0 %447
      %vm456 = vcmask 72752
      %457 = vst.msk [vmem:[#allocation2] sm:$0xff] %vm456, %v436
      %458 = vst.msk [vmem:[#allocation2 + $0x8] sm:$0xff] %vm456, %v438
      %459 = vst.msk [vmem:[#allocation2 + $0x10] sm:$0xff] %vm456, %v440
      %460 = vst.msk [vmem:[#allocation2 + $0x18] sm:$0xff] %vm456, %v442
      %461 = vst.msk [vmem:[#allocation2 + $0x20] sm:$0xff] %vm456, %v444
      %462 = vst.msk [vmem:[#allocation2 + $0x28] sm:$0xff] %vm456, %v446
      %463 = vst.msk [vmem:[#allocation2 + $0x30] sm:$0xff] %vm456, %v448
      %vm464 = vsmask.f32 6400
      %v465 = vrot.slane %v301, 1
      %v466 = vrot.slane %v303, 2
      %v467 = vor.u32 %v465, %v466
      %v468 = vshrl.u32 %v292, 16
      %v470 = vrot.slane %v468, 1
      %v471 = vrot.slane %v308, 2
      %v472 = vor.u32 %v470, %v471
      %v473 = vsel %vm464, %v467, %v472
      %v474 = vrot.slane %v313, 1
      %v475 = vrot.slane %v315, 2
      %v476 = vor.u32 %v474, %v475
      %v477 = vshrl.u32 %v293, 16
      %v479 = vrot.slane %v477, 1
      %v480 = vrot.slane %v320, 2
      %v481 = vor.u32 %v479, %v480
      %v482 = vsel %vm464, %v476, %v481
      %v483 = vrot.slane %v325, 1
      %v484 = vrot.slane %v327, 2
      %v485 = vor.u32 %v483, %v484
      %v486 = vshrl.u32 %v294, 16
      %v488 = vrot.slane %v486, 1
      %v489 = vrot.slane %v332, 2
      %v490 = vor.u32 %v488, %v489
      %v491 = vsel %vm464, %v485, %v490
      %v492 = vrot.slane %v337, 1
      %v493 = vrot.slane %v339, 2
      %v494 = vor.u32 %v492, %v493
      %v495 = vshrl.u32 %v295, 16
      %v497 = vrot.slane %v495, 1
      %v498 = vrot.slane %v344, 2
      %v499 = vor.u32 %v497, %v498
      %v500 = vsel %vm464, %v494, %v499
      %v501 = vrot.slane %v349, 1
      %v502 = vrot.slane %v351, 2
      %v503 = vor.u32 %v501, %v502
      %v504 = vshrl.u32 %v296, 16
      %v506 = vrot.slane %v504, 1
      %v507 = vrot.slane %v356, 2
      %v508 = vor.u32 %v506, %v507
      %v509 = vsel %vm464, %v503, %v508
      %v510 = vrot.slane %v361, 1
      %v511 = vrot.slane %v363, 2
      %v512 = vor.u32 %v510, %v511
      %v513 = vshrl.u32 %v297, 16
      %v515 = vrot.slane %v513, 1
      %v516 = vrot.slane %v368, 2
      %v517 = vor.u32 %v515, %v516
      %v518 = vsel %vm464, %v512, %v517
      %v519 = vrot.slane %v373, 1
      %v520 = vrot.slane %v375, 2
      %v521 = vor.u32 %v519, %v520
      %v522 = vshrl.u32 %v298, 16
      %v524 = vrot.slane %v522, 1
      %v525 = vrot.slane %v380, 2
      %v526 = vor.u32 %v524, %v525
      %v527 = vsel %vm464, %v521, %v526
      %528 = vrot.lane.b32.xlu0 %v473, 9
      %v529 = vpop.permute.xlu0 %528
      %530 = vrot.lane.b32.xlu0 %v482, 9
      %v531 = vpop.permute.xlu0 %530
      %532 = vrot.lane.b32.xlu0 %v491, 9
      %v533 = vpop.permute.xlu0 %532
      %534 = vrot.lane.b32.xlu0 %v500, 9
      %v535 = vpop.permute.xlu0 %534
      %536 = vrot.lane.b32.xlu0 %v509, 9
      %v537 = vpop.permute.xlu0 %536
      %538 = vrot.lane.b32.xlu0 %v518, 9
      %v539 = vpop.permute.xlu0 %538
      %540 = vrot.lane.b32.xlu0 %v527, 9
      %v541 = vpop.permute.xlu0 %540
      %vm549 = vcmask 97352
      %550 = vst.msk [vmem:[#allocation2] sm:$0xff] %vm549, %v529
      %551 = vst.msk [vmem:[#allocation2 + $0x8] sm:$0xff] %vm549, %v531
      %552 = vst.msk [vmem:[#allocation2 + $0x10] sm:$0xff] %vm549, %v533
      %553 = vst.msk [vmem:[#allocation2 + $0x18] sm:$0xff] %vm549, %v535
      %554 = vst.msk [vmem:[#allocation2 + $0x20] sm:$0xff] %vm549, %v537
      %555 = vst.msk [vmem:[#allocation2 + $0x28] sm:$0xff] %vm549, %v539
      %556 = vst.msk [vmem:[#allocation2 + $0x30] sm:$0xff] %vm549, %v541
      %vm557 = vcmask 1045504
      %v558 = vrot.slane %v256, 2
      %v559 = vrot.slane %v292, 2
      %v560 = vsel %vm557, %v558, %v559
      %v561 = vrot.slane %v257, 2
      %v562 = vrot.slane %v293, 2
      %v563 = vsel %vm557, %v561, %v562
      %v564 = vrot.slane %v258, 2
      %v565 = vrot.slane %v294, 2
      %v566 = vsel %vm557, %v564, %v565
      %v567 = vrot.slane %v259, 2
      %v568 = vrot.slane %v295, 2
      %v569 = vsel %vm557, %v567, %v568
      %v570 = vrot.slane %v260, 2
      %v571 = vrot.slane %v296, 2
      %v572 = vsel %vm557, %v570, %v571
      %v573 = vrot.slane %v261, 2
      %v574 = vrot.slane %v297, 2
      %v575 = vsel %vm557, %v573, %v574
      %v576 = vrot.slane %v262, 2
      %v577 = vrot.slane %v298, 2
      %v578 = vsel %vm557, %v576, %v577
      %579 = vrot.lane.b32.xlu0 %v560, 12
      %v580 = vpop.permute.xlu0 %579
      %581 = vrot.lane.b32.xlu0 %v563, 12
      %v582 = vpop.permute.xlu0 %581
      %583 = vrot.lane.b32.xlu0 %v566, 12
      %v584 = vpop.permute.xlu0 %583
      %585 = vrot.lane.b32.xlu0 %v569, 12
      %v586 = vpop.permute.xlu0 %585
      %587 = vrot.lane.b32.xlu0 %v572, 12
      %v588 = vpop.permute.xlu0 %587
      %589 = vrot.lane.b32.xlu0 %v575, 12
      %v590 = vpop.permute.xlu0 %589
      %591 = vrot.lane.b32.xlu0 %v578, 12
      %v592 = vpop.permute.xlu0 %591
      %vm600 = vcmask 121952
      %601 = vst.msk [vmem:[#allocation2] sm:$0xff] %vm600, %v580
      %602 = vst.msk [vmem:[#allocation2 + $0x8] sm:$0xff] %vm600, %v582
      %603 = vst.msk [vmem:[#allocation2 + $0x10] sm:$0xff] %vm600, %v584
      %604 = vst.msk [vmem:[#allocation2 + $0x18] sm:$0xff] %vm600, %v586
      %605 = vst.msk [vmem:[#allocation2 + $0x20] sm:$0xff] %vm600, %v588
      %606 = vst.msk [vmem:[#allocation2 + $0x28] sm:$0xff] %vm600, %v590
      %607 = vst.msk [vmem:[#allocation2 + $0x30] sm:$0xff] %vm600, %v592
      %s608 = sadd.s32 %s195, 1
      %s609 = smul.u32 %s608, 3
      %s610 = smul.addr %s609, 4
      %s611 = scalar_lea.vmem %s183, %s610
      %v612 = vld [vmem:[%s611] sm:$0xf]
      %v613 = vld [vmem:[%s611 + $0x4] sm:$0xf]
      %v614 = vld [vmem:[%s611 + $0x8] sm:$0x3]
      %v615 = vld [vmem:[%s611 + $0xc] sm:$0xf]
      %v616 = vld [vmem:[%s611 + $0x10] sm:$0xf]
      %v617 = vld [vmem:[%s611 + $0x14] sm:$0x3]
      %v618 = vld [vmem:[%s611 + $0x18] sm:$0xf]
      %v619 = vld [vmem:[%s611 + $0x1c] sm:$0xf]
      %v620 = vld [vmem:[%s611 + $0x20] sm:$0x3]
      %v621 = vld [vmem:[%s611 + $0x24] sm:$0xf]
      %v622 = vld [vmem:[%s611 + $0x28] sm:$0xf]
      %v623 = vld [vmem:[%s611 + $0x2c] sm:$0x3]
      %v624 = vld [vmem:[%s611 + $0x30] sm:$0xf]
      %v625 = vld [vmem:[%s611 + $0x34] sm:$0xf]
      %v626 = vld [vmem:[%s611 + $0x38] sm:$0x3]
      %v627 = vld [vmem:[%s611 + $0x3c] sm:$0xf]
      %v628 = vld [vmem:[%s611 + $0x40] sm:$0xf]
      %v629 = vld [vmem:[%s611 + $0x44] sm:$0x3]
      %v630 = vld [vmem:[%s611 + $0x48] sm:$0xf]
      %v631 = vld [vmem:[%s611 + $0x4c] sm:$0xf]
      %v632 = vld [vmem:[%s611 + $0x50] sm:$0x3]
      %v647 = vunpack.c.l.b16 %v612
      %v648 = vunpack.c.l.b16 %v613
      %v649 = vunpack.c.l.b16 %v615
      %v650 = vunpack.c.l.b16 %v616
      %v651 = vunpack.c.l.b16 %v618
      %v652 = vunpack.c.l.b16 %v619
      %v653 = vunpack.c.l.b16 %v621
      %v654 = vunpack.c.l.b16 %v622
      %v655 = vunpack.c.l.b16 %v624
      %v656 = vunpack.c.l.b16 %v625
      %v657 = vunpack.c.l.b16 %v627
      %v658 = vunpack.c.l.b16 %v628
      %v659 = vunpack.c.l.b16 %v630
      %v660 = vunpack.c.l.b16 %v631
      %v661 = vpack.c.b16 %v648, %v647
      %v662 = vpack.c.b16 %v650, %v649
      %v663 = vpack.c.b16 %v652, %v651
      %v664 = vpack.c.b16 %v654, %v653
      %v665 = vpack.c.b16 %v656, %v655
      %v666 = vpack.c.b16 %v658, %v657
      %v667 = vpack.c.b16 %v660, %v659
      %668 = vrot.lane.b32.xlu0 %v661, 15
      %v669 = vpop.permute.xlu0 %668
      %670 = vrot.lane.b32.xlu0 %v662, 15
      %v671 = vpop.permute.xlu0 %670
      %672 = vrot.lane.b32.xlu0 %v663, 15
      %v673 = vpop.permute.xlu0 %672
      %674 = vrot.lane.b32.xlu0 %v664, 15
      %v675 = vpop.permute.xlu0 %674
      %676 = vrot.lane.b32.xlu0 %v665, 15
      %v677 = vpop.permute.xlu0 %676
      %678 = vrot.lane.b32.xlu0 %v666, 15
      %v679 = vpop.permute.xlu0 %678
      %680 = vrot.lane.b32.xlu0 %v667, 15
      %v681 = vpop.permute.xlu0 %680
      %vm689 = vcmask 146552
      %690 = vst.msk [vmem:[#allocation2] sm:$0xff] %vm689, %v669
      %691 = vst.msk [vmem:[#allocation2 + $0x8] sm:$0xff] %vm689, %v671
      %692 = vst.msk [vmem:[#allocation2 + $0x10] sm:$0xff] %vm689, %v673
      %693 = vst.msk [vmem:[#allocation2 + $0x18] sm:$0xff] %vm689, %v675
      %694 = vst.msk [vmem:[#allocation2 + $0x20] sm:$0xff] %vm689, %v677
      %695 = vst.msk [vmem:[#allocation2 + $0x28] sm:$0xff] %vm689, %v679
      %696 = vst.msk [vmem:[#allocation2 + $0x30] sm:$0xff] %vm689, %v681
      %v704 = vunpack.c.l.b16 %v614
      %v705 = vunpack.c.l.b16 %v617
      %v706 = vunpack.c.l.b16 %v620
      %v707 = vunpack.c.l.b16 %v623
      %v708 = vunpack.c.l.b16 %v626
      %v709 = vunpack.c.l.b16 %v629
      %v710 = vunpack.c.l.b16 %v632
      %v711 = vpack.c.b16 %v704, %v704
      %v712 = vpack.c.b16 %v705, %v705
      %v713 = vpack.c.b16 %v706, %v706
      %v714 = vpack.c.b16 %v707, %v707
      %v715 = vpack.c.b16 %v708, %v708
      %v716 = vpack.c.b16 %v709, %v709
      %v717 = vpack.c.b16 %v710, %v710
      %v719 = vshrl.u32 %v661, 16
      %v721 = vshll.u32 %v661, 16
      %v723 = vrot.slane %v721, 1
      %v724 = vor.u32 %v719, %v723
      %v726 = vshll.u32 %v711, 16
      %v728 = vrot.slane %v726, 1
      %v729 = vsel %vm299, %v724, %v728
      %v731 = vshrl.u32 %v662, 16
      %v733 = vshll.u32 %v662, 16
      %v735 = vrot.slane %v733, 1
      %v736 = vor.u32 %v731, %v735
      %v738 = vshll.u32 %v712, 16
      %v740 = vrot.slane %v738, 1
      %v741 = vsel %vm299, %v736, %v740
      %v743 = vshrl.u32 %v663, 16
      %v745 = vshll.u32 %v663, 16
      %v747 = vrot.slane %v745, 1
      %v748 = vor.u32 %v743, %v747
      %v750 = vshll.u32 %v713, 16
      %v752 = vrot.slane %v750, 1
      %v753 = vsel %vm299, %v748, %v752
      %v755 = vshrl.u32 %v664, 16
      %v757 = vshll.u32 %v664, 16
      %v759 = vrot.slane %v757, 1
      %v760 = vor.u32 %v755, %v759
      %v762 = vshll.u32 %v714, 16
      %v764 = vrot.slane %v762, 1
      %v765 = vsel %vm299, %v760, %v764
      %v767 = vshrl.u32 %v665, 16
      %v769 = vshll.u32 %v665, 16
      %v771 = vrot.slane %v769, 1
      %v772 = vor.u32 %v767, %v771
      %v774 = vshll.u32 %v715, 16
      %v776 = vrot.slane %v774, 1
      %v777 = vsel %vm299, %v772, %v776
      %v779 = vshrl.u32 %v666, 16
      %v781 = vshll.u32 %v666, 16
      %v783 = vrot.slane %v781, 1
      %v784 = vor.u32 %v779, %v783
      %v786 = vshll.u32 %v716, 16
      %v788 = vrot.slane %v786, 1
      %v789 = vsel %vm299, %v784, %v788
      %v791 = vshrl.u32 %v667, 16
      %v793 = vshll.u32 %v667, 16
      %v795 = vrot.slane %v793, 1
      %v796 = vor.u32 %v791, %v795
      %v798 = vshll.u32 %v717, 16
      %v800 = vrot.slane %v798, 1
      %v801 = vsel %vm299, %v796, %v800
      %802 = vrot.lane.b32.xlu0 %v729, 18
      %v803 = vpop.permute.xlu0 %802
      %804 = vrot.lane.b32.xlu0 %v741, 18
      %v805 = vpop.permute.xlu0 %804
      %806 = vrot.lane.b32.xlu0 %v753, 18
      %v807 = vpop.permute.xlu0 %806
      %808 = vrot.lane.b32.xlu0 %v765, 18
      %v809 = vpop.permute.xlu0 %808
      %810 = vrot.lane.b32.xlu0 %v777, 18
      %v811 = vpop.permute.xlu0 %810
      %812 = vrot.lane.b32.xlu0 %v789, 18
      %v813 = vpop.permute.xlu0 %812
      %814 = vrot.lane.b32.xlu0 %v801, 18
      %v815 = vpop.permute.xlu0 %814
      %vm823 = vcmask 171152
      %824 = vst.msk [vmem:[#allocation2] sm:$0xff] %vm823, %v803
      %825 = vst.msk [vmem:[#allocation2 + $0x8] sm:$0xff] %vm823, %v805
      %826 = vst.msk [vmem:[#allocation2 + $0x10] sm:$0xff] %vm823, %v807
      %827 = vst.msk [vmem:[#allocation2 + $0x18] sm:$0xff] %vm823, %v809
      %828 = vst.msk [vmem:[#allocation2 + $0x20] sm:$0xff] %vm823, %v811
      %829 = vst.msk [vmem:[#allocation2 + $0x28] sm:$0xff] %vm823, %v813
      %830 = vst.msk [vmem:[#allocation2 + $0x30] sm:$0xff] %vm823, %v815
      %v831 = vrot.slane %v661, 1
      %v832 = vrot.slane %v711, 1
      %v833 = vsel %vm413, %v831, %v832
      %v834 = vrot.slane %v662, 1
      %v835 = vrot.slane %v712, 1
      %v836 = vsel %vm413, %v834, %v835
      %v837 = vrot.slane %v663, 1
      %v838 = vrot.slane %v713, 1
      %v839 = vsel %vm413, %v837, %v838
      %v840 = vrot.slane %v664, 1
      %v841 = vrot.slane %v714, 1
      %v842 = vsel %vm413, %v840, %v841
      %v843 = vrot.slane %v665, 1
      %v844 = vrot.slane %v715, 1
      %v845 = vsel %vm413, %v843, %v844
      %v846 = vrot.slane %v666, 1
      %v847 = vrot.slane %v716, 1
      %v848 = vsel %vm413, %v846, %v847
      %v849 = vrot.slane %v667, 1
      %v850 = vrot.slane %v717, 1
      %v851 = vsel %vm413, %v849, %v850
      %852 = vrot.lane.b32.xlu0 %v833, 21
      %v853 = vpop.permute.xlu0 %852
      %854 = vrot.lane.b32.xlu0 %v836, 21
      %v855 = vpop.permute.xlu0 %854
      %856 = vrot.lane.b32.xlu0 %v839, 21
      %v857 = vpop.permute.xlu0 %856
      %858 = vrot.lane.b32.xlu0 %v842, 21
      %v859 = vpop.permute.xlu0 %858
      %860 = vrot.lane.b32.xlu0 %v845, 21
      %v861 = vpop.permute.xlu0 %860
      %862 = vrot.lane.b32.xlu0 %v848, 21
      %v863 = vpop.permute.xlu0 %862
      %864 = vrot.lane.b32.xlu0 %v851, 21
      %v865 = vpop.permute.xlu0 %864
      %vm873 = vcmask 195752
      %874 = vst.msk [vmem:[#allocation2] sm:$0xff] %vm873, %v853
      %875 = vst.msk [vmem:[#allocation2 + $0x8] sm:$0xff] %vm873, %v855
      %876 = vst.msk [vmem:[#allocation2 + $0x10] sm:$0xff] %vm873, %v857
      %877 = vst.msk [vmem:[#allocation2 + $0x18] sm:$0xff] %vm873, %v859
      %878 = vst.msk [vmem:[#allocation2 + $0x20] sm:$0xff] %vm873, %v861
      %879 = vst.msk [vmem:[#allocation2 + $0x28] sm:$0xff] %vm873, %v863
      %880 = vst.msk [vmem:[#allocation2 + $0x30] sm:$0xff] %vm873, %v865
      %v881 = vrot.slane %v719, 1
      %v882 = vrot.slane %v721, 2
      %v883 = vor.u32 %v881, %v882
      %v884 = vshrl.u32 %v711, 16
      %v886 = vrot.slane %v884, 1
      %v887 = vrot.slane %v726, 2
      %v888 = vor.u32 %v886, %v887
      %v889 = vsel %vm464, %v883, %v888
      %v890 = vrot.slane %v731, 1
      %v891 = vrot.slane %v733, 2
      %v892 = vor.u32 %v890, %v891
      %v893 = vshrl.u32 %v712, 16
      %v895 = vrot.slane %v893, 1
      %v896 = vrot.slane %v738, 2
      %v897 = vor.u32 %v895, %v896
      %v898 = vsel %vm464, %v892, %v897
      %v899 = vrot.slane %v743, 1
      %v900 = vrot.slane %v745, 2
      %v901 = vor.u32 %v899, %v900
      %v902 = vshrl.u32 %v713, 16
      %v904 = vrot.slane %v902, 1
      %v905 = vrot.slane %v750, 2
      %v906 = vor.u32 %v904, %v905
      %v907 = vsel %vm464, %v901, %v906
      %v908 = vrot.slane %v755, 1
      %v909 = vrot.slane %v757, 2
      %v910 = vor.u32 %v908, %v909
      %v911 = vshrl.u32 %v714, 16
      %v913 = vrot.slane %v911, 1
      %v914 = vrot.slane %v762, 2
      %v915 = vor.u32 %v913, %v914
      %v916 = vsel %vm464, %v910, %v915
      %v917 = vrot.slane %v767, 1
      %v918 = vrot.slane %v769, 2
      %v919 = vor.u32 %v917, %v918
      %v920 = vshrl.u32 %v715, 16
      %v922 = vrot.slane %v920, 1
      %v923 = vrot.slane %v774, 2
      %v924 = vor.u32 %v922, %v923
      %v925 = vsel %vm464, %v919, %v924
      %v926 = vrot.slane %v779, 1
      %v927 = vrot.slane %v781, 2
      %v928 = vor.u32 %v926, %v927
      %v929 = vshrl.u32 %v716, 16
      %v931 = vrot.slane %v929, 1
      %v932 = vrot.slane %v786, 2
      %v933 = vor.u32 %v931, %v932
      %v934 = vsel %vm464, %v928, %v933
      %v935 = vrot.slane %v791, 1
      %v936 = vrot.slane %v793, 2
      %v937 = vor.u32 %v935, %v936
      %v938 = vshrl.u32 %v717, 16
      %v940 = vrot.slane %v938, 1
      %v941 = vrot.slane %v798, 2
      %v942 = vor.u32 %v940, %v941
      %v943 = vsel %vm464, %v937, %v942
      %944 = vrot.lane.b32.xlu0 %v889, 24
      %v945 = vpop.permute.xlu0 %944
      %946 = vrot.lane.b32.xlu0 %v898, 24
      %v947 = vpop.permute.xlu0 %946
      %948 = vrot.lane.b32.xlu0 %v907, 24
      %v949 = vpop.permute.xlu0 %948
      %950 = vrot.lane.b32.xlu0 %v916, 24
      %v951 = vpop.permute.xlu0 %950
      %952 = vrot.lane.b32.xlu0 %v925, 24
      %v953 = vpop.permute.xlu0 %952
      %954 = vrot.lane.b32.xlu0 %v934, 24
      %v955 = vpop.permute.xlu0 %954
      %956 = vrot.lane.b32.xlu0 %v943, 24
      %v957 = vpop.permute.xlu0 %956
      %vm965 = vcmask 220352
      %966 = vst.msk [vmem:[#allocation2] sm:$0xff] %vm965, %v945
      %967 = vst.msk [vmem:[#allocation2 + $0x8] sm:$0xff] %vm965, %v947
      %968 = vst.msk [vmem:[#allocation2 + $0x10] sm:$0xff] %vm965, %v949
      %969 = vst.msk [vmem:[#allocation2 + $0x18] sm:$0xff] %vm965, %v951
      %970 = vst.msk [vmem:[#allocation2 + $0x20] sm:$0xff] %vm965, %v953
      %971 = vst.msk [vmem:[#allocation2 + $0x28] sm:$0xff] %vm965, %v955
      %972 = vst.msk [vmem:[#allocation2 + $0x30] sm:$0xff] %vm965, %v957
      %v973 = vrot.slane %v661, 2
      %v974 = vrot.slane %v711, 2
      %v975 = vsel %vm557, %v973, %v974
      %v976 = vrot.slane %v662, 2
      %v977 = vrot.slane %v712, 2
      %v978 = vsel %vm557, %v976, %v977
      %v979 = vrot.slane %v663, 2
      %v980 = vrot.slane %v713, 2
      %v981 = vsel %vm557, %v979, %v980
      %v982 = vrot.slane %v664, 2
      %v983 = vrot.slane %v714, 2
      %v984 = vsel %vm557, %v982, %v983
      %v985 = vrot.slane %v665, 2
      %v986 = vrot.slane %v715, 2
      %v987 = vsel %vm557, %v985, %v986
      %v988 = vrot.slane %v666, 2
      %v989 = vrot.slane %v716, 2
      %v990 = vsel %vm557, %v988, %v989
      %v991 = vrot.slane %v667, 2
      %v992 = vrot.slane %v717, 2
      %v993 = vsel %vm557, %v991, %v992
      %994 = vrot.lane.b32.xlu0 %v975, 27
      %v995 = vpop.permute.xlu0 %994
      %996 = vrot.lane.b32.xlu0 %v978, 27
      %v997 = vpop.permute.xlu0 %996
      %998 = vrot.lane.b32.xlu0 %v981, 27
      %v999 = vpop.permute.xlu0 %998
      %1000 = vrot.lane.b32.xlu0 %v984, 27
      %v1001 = vpop.permute.xlu0 %1000
      %1002 = vrot.lane.b32.xlu0 %v987, 27
      %v1003 = vpop.permute.xlu0 %1002
      %1004 = vrot.lane.b32.xlu0 %v990, 27
      %v1005 = vpop.permute.xlu0 %1004
      %1006 = vrot.lane.b32.xlu0 %v993, 27
      %v1007 = vpop.permute.xlu0 %1006
      %vm1015 = vcmask 244952
      %1016 = vst.msk [vmem:[#allocation2] sm:$0xff] %vm1015, %v995
      %1017 = vst.msk [vmem:[#allocation2 + $0x8] sm:$0xff] %vm1015, %v997
      %1018 = vst.msk [vmem:[#allocation2 + $0x10] sm:$0xff] %vm1015, %v999
      %1019 = vst.msk [vmem:[#allocation2 + $0x18] sm:$0xff] %vm1015, %v1001
      %1020 = vst.msk [vmem:[#allocation2 + $0x20] sm:$0xff] %vm1015, %v1003
      %1021 = vst.msk [vmem:[#allocation2 + $0x28] sm:$0xff] %vm1015, %v1005
      %1022 = vst.msk [vmem:[#allocation2 + $0x30] sm:$0xff] %vm1015, %v1007
      %s1023 = sadd.s32 %s195, 2
      %s1024 = smul.u32 %s1023, 3
      %s1025 = smul.addr %s1024, 4
      %s1026 = scalar_lea.vmem %s183, %s1025
      %v1027 = vld [vmem:[%s1026] sm:$0xf]
      %v1028 = vld [vmem:[%s1026 + $0x4] sm:$0xf]
      %v1029 = vld [vmem:[%s1026 + $0x8] sm:$0x3]
      %v1030 = vld [vmem:[%s1026 + $0xc] sm:$0xf]
      %v1031 = vld [vmem:[%s1026 + $0x10] sm:$0xf]
      %v1032 = vld [vmem:[%s1026 + $0x14] sm:$0x3]
      %v1033 = vld [vmem:[%s1026 + $0x18] sm:$0xf]
      %v1034 = vld [vmem:[%s1026 + $0x1c] sm:$0xf]
      %v1035 = vld [vmem:[%s1026 + $0x20] sm:$0x3]
      %v1036 = vld [vmem:[%s1026 + $0x24] sm:$0xf]
      %v1037 = vld [vmem:[%s1026 + $0x28] sm:$0xf]
      %v1038 = vld [vmem:[%s1026 + $0x2c] sm:$0x3]
      %v1039 = vld [vmem:[%s1026 + $0x30] sm:$0xf]
      %v1040 = vld [vmem:[%s1026 + $0x34] sm:$0xf]
      %v1041 = vld [vmem:[%s1026 + $0x38] sm:$0x3]
      %v1042 = vld [vmem:[%s1026 + $0x3c] sm:$0xf]
      %v1043 = vld [vmem:[%s1026 + $0x40] sm:$0xf]
      %v1044 = vld [vmem:[%s1026 + $0x44] sm:$0x3]
      %v1045 = vld [vmem:[%s1026 + $0x48] sm:$0xf]
      %v1046 = vld [vmem:[%s1026 + $0x4c] sm:$0xf]
      %v1047 = vld [vmem:[%s1026 + $0x50] sm:$0x3]
      %v1062 = vunpack.c.l.b16 %v1027
      %v1063 = vunpack.c.l.b16 %v1028
      %v1064 = vunpack.c.l.b16 %v1030
      %v1065 = vunpack.c.l.b16 %v1031
      %v1066 = vunpack.c.l.b16 %v1033
      %v1067 = vunpack.c.l.b16 %v1034
      %v1068 = vunpack.c.l.b16 %v1036
      %v1069 = vunpack.c.l.b16 %v1037
      %v1070 = vunpack.c.l.b16 %v1039
      %v1071 = vunpack.c.l.b16 %v1040
      %v1072 = vunpack.c.l.b16 %v1042
      %v1073 = vunpack.c.l.b16 %v1043
      %v1074 = vunpack.c.l.b16 %v1045
      %v1075 = vunpack.c.l.b16 %v1046
      %v1076 = vpack.c.b16 %v1063, %v1062
      %v1077 = vpack.c.b16 %v1065, %v1064
      %v1078 = vpack.c.b16 %v1067, %v1066
      %v1079 = vpack.c.b16 %v1069, %v1068
      %v1080 = vpack.c.b16 %v1071, %v1070
      %v1081 = vpack.c.b16 %v1073, %v1072
      %v1082 = vpack.c.b16 %v1075, %v1074
      %1083 = vrot.lane.b32.xlu0 %v1076, 30
      %v1084 = vpop.permute.xlu0 %1083
      %1085 = vrot.lane.b32.xlu0 %v1077, 30
      %v1086 = vpop.permute.xlu0 %1085
      %1087 = vrot.lane.b32.xlu0 %v1078, 30
      %v1088 = vpop.permute.xlu0 %1087
      %1089 = vrot.lane.b32.xlu0 %v1079, 30
      %v1090 = vpop.permute.xlu0 %1089
      %1091 = vrot.lane.b32.xlu0 %v1080, 30
      %v1092 = vpop.permute.xlu0 %1091
      %1093 = vrot.lane.b32.xlu0 %v1081, 30
      %v1094 = vpop.permute.xlu0 %1093
      %1095 = vrot.lane.b32.xlu0 %v1082, 30
      %v1096 = vpop.permute.xlu0 %1095
      %vm1104 = vcmask 269552
      %1105 = vst.msk [vmem:[#allocation2] sm:$0xff] %vm1104, %v1084
      %1106 = vst.msk [vmem:[#allocation2 + $0x8] sm:$0xff] %vm1104, %v1086
      %1107 = vst.msk [vmem:[#allocation2 + $0x10] sm:$0xff] %vm1104, %v1088
      %1108 = vst.msk [vmem:[#allocation2 + $0x18] sm:$0xff] %vm1104, %v1090
      %1109 = vst.msk [vmem:[#allocation2 + $0x20] sm:$0xff] %vm1104, %v1092
      %1110 = vst.msk [vmem:[#allocation2 + $0x28] sm:$0xff] %vm1104, %v1094
      %1111 = vst.msk [vmem:[#allocation2 + $0x30] sm:$0xff] %vm1104, %v1096
      %v1119 = vunpack.c.l.b16 %v1029
      %v1120 = vunpack.c.l.b16 %v1032
      %v1121 = vunpack.c.l.b16 %v1035
      %v1122 = vunpack.c.l.b16 %v1038
      %v1123 = vunpack.c.l.b16 %v1041
      %v1124 = vunpack.c.l.b16 %v1044
      %v1125 = vunpack.c.l.b16 %v1047
      %v1126 = vpack.c.b16 %v1119, %v1119
      %v1127 = vpack.c.b16 %v1120, %v1120
      %v1128 = vpack.c.b16 %v1121, %v1121
      %v1129 = vpack.c.b16 %v1122, %v1122
      %v1130 = vpack.c.b16 %v1123, %v1123
      %v1131 = vpack.c.b16 %v1124, %v1124
      %v1132 = vpack.c.b16 %v1125, %v1125
      %v1134 = vshrl.u32 %v1076, 16
      %v1136 = vshll.u32 %v1076, 16
      %v1138 = vrot.slane %v1136, 1
      %v1139 = vor.u32 %v1134, %v1138
      %v1141 = vshll.u32 %v1126, 16
      %v1143 = vrot.slane %v1141, 1
      %v1144 = vsel %vm299, %v1139, %v1143
      %v1146 = vshrl.u32 %v1077, 16
      %v1148 = vshll.u32 %v1077, 16
      %v1150 = vrot.slane %v1148, 1
      %v1151 = vor.u32 %v1146, %v1150
      %v1153 = vshll.u32 %v1127, 16
      %v1155 = vrot.slane %v1153, 1
      %v1156 = vsel %vm299, %v1151, %v1155
      %v1158 = vshrl.u32 %v1078, 16
      %v1160 = vshll.u32 %v1078, 16
      %v1162 = vrot.slane %v1160, 1
      %v1163 = vor.u32 %v1158, %v1162
      %v1165 = vshll.u32 %v1128, 16
      %v1167 = vrot.slane %v1165, 1
      %v1168 = vsel %vm299, %v1163, %v1167
      %v1170 = vshrl.u32 %v1079, 16
      %v1172 = vshll.u32 %v1079, 16
      %v1174 = vrot.slane %v1172, 1
      %v1175 = vor.u32 %v1170, %v1174
      %v1177 = vshll.u32 %v1129, 16
      %v1179 = vrot.slane %v1177, 1
      %v1180 = vsel %vm299, %v1175, %v1179
      %v1182 = vshrl.u32 %v1080, 16
      %v1184 = vshll.u32 %v1080, 16
      %v1186 = vrot.slane %v1184, 1
      %v1187 = vor.u32 %v1182, %v1186
      %v1189 = vshll.u32 %v1130, 16
      %v1191 = vrot.slane %v1189, 1
      %v1192 = vsel %vm299, %v1187, %v1191
      %v1194 = vshrl.u32 %v1081, 16
      %v1196 = vshll.u32 %v1081, 16
      %v1198 = vrot.slane %v1196, 1
      %v1199 = vor.u32 %v1194, %v1198
      %v1201 = vshll.u32 %v1131, 16
      %v1203 = vrot.slane %v1201, 1
      %v1204 = vsel %vm299, %v1199, %v1203
      %v1206 = vshrl.u32 %v1082, 16
      %v1208 = vshll.u32 %v1082, 16
      %v1210 = vrot.slane %v1208, 1
      %v1211 = vor.u32 %v1206, %v1210
      %v1213 = vshll.u32 %v1132, 16
      %v1215 = vrot.slane %v1213, 1
      %v1216 = vsel %vm299, %v1211, %v1215
      %1217 = vrot.lane.b32.xlu0 %v1144, 33
      %v1218 = vpop.permute.xlu0 %1217
      %1219 = vrot.lane.b32.xlu0 %v1156, 33
      %v1220 = vpop.permute.xlu0 %1219
      %1221 = vrot.lane.b32.xlu0 %v1168, 33
      %v1222 = vpop.permute.xlu0 %1221
      %1223 = vrot.lane.b32.xlu0 %v1180, 33
      %v1224 = vpop.permute.xlu0 %1223
      %1225 = vrot.lane.b32.xlu0 %v1192, 33
      %v1226 = vpop.permute.xlu0 %1225
      %1227 = vrot.lane.b32.xlu0 %v1204, 33
      %v1228 = vpop.permute.xlu0 %1227
      %1229 = vrot.lane.b32.xlu0 %v1216, 33
      %v1230 = vpop.permute.xlu0 %1229
      %vm1238 = vcmask 294152
      %1239 = vst.msk [vmem:[#allocation2] sm:$0xff] %vm1238, %v1218
      %1240 = vst.msk [vmem:[#allocation2 + $0x8] sm:$0xff] %vm1238, %v1220
      %1241 = vst.msk [vmem:[#allocation2 + $0x10] sm:$0xff] %vm1238, %v1222
      %1242 = vst.msk [vmem:[#allocation2 + $0x18] sm:$0xff] %vm1238, %v1224
      %1243 = vst.msk [vmem:[#allocation2 + $0x20] sm:$0xff] %vm1238, %v1226
      %1244 = vst.msk [vmem:[#allocation2 + $0x28] sm:$0xff] %vm1238, %v1228
      %1245 = vst.msk [vmem:[#allocation2 + $0x30] sm:$0xff] %vm1238, %v1230
      %v1246 = vrot.slane %v1076, 1
      %v1247 = vrot.slane %v1126, 1
      %v1248 = vsel %vm413, %v1246, %v1247
      %v1249 = vrot.slane %v1077, 1
      %v1250 = vrot.slane %v1127, 1
      %v1251 = vsel %vm413, %v1249, %v1250
      %v1252 = vrot.slane %v1078, 1
      %v1253 = vrot.slane %v1128, 1
      %v1254 = vsel %vm413, %v1252, %v1253
      %v1255 = vrot.slane %v1079, 1
      %v1256 = vrot.slane %v1129, 1
      %v1257 = vsel %vm413, %v1255, %v1256
      %v1258 = vrot.slane %v1080, 1
      %v1259 = vrot.slane %v1130, 1
      %v1260 = vsel %vm413, %v1258, %v1259
      %v1261 = vrot.slane %v1081, 1
      %v1262 = vrot.slane %v1131, 1
      %v1263 = vsel %vm413, %v1261, %v1262
      %v1264 = vrot.slane %v1082, 1
      %v1265 = vrot.slane %v1132, 1
      %v1266 = vsel %vm413, %v1264, %v1265
      %1267 = vrot.lane.b32.xlu0 %v1248, 36
      %v1268 = vpop.permute.xlu0 %1267
      %1269 = vrot.lane.b32.xlu0 %v1251, 36
      %v1270 = vpop.permute.xlu0 %1269
      %1271 = vrot.lane.b32.xlu0 %v1254, 36
      %v1272 = vpop.permute.xlu0 %1271
      %1273 = vrot.lane.b32.xlu0 %v1257, 36
      %v1274 = vpop.permute.xlu0 %1273
      %1275 = vrot.lane.b32.xlu0 %v1260, 36
      %v1276 = vpop.permute.xlu0 %1275
      %1277 = vrot.lane.b32.xlu0 %v1263, 36
      %v1278 = vpop.permute.xlu0 %1277
      %1279 = vrot.lane.b32.xlu0 %v1266, 36
      %v1280 = vpop.permute.xlu0 %1279
      %vm1288 = vcmask 318752
      %1289 = vst.msk [vmem:[#allocation2] sm:$0xff] %vm1288, %v1268
      %1290 = vst.msk [vmem:[#allocation2 + $0x8] sm:$0xff] %vm1288, %v1270
      %1291 = vst.msk [vmem:[#allocation2 + $0x10] sm:$0xff] %vm1288, %v1272
      %1292 = vst.msk [vmem:[#allocation2 + $0x18] sm:$0xff] %vm1288, %v1274
      %1293 = vst.msk [vmem:[#allocation2 + $0x20] sm:$0xff] %vm1288, %v1276
      %1294 = vst.msk [vmem:[#allocation2 + $0x28] sm:$0xff] %vm1288, %v1278
      %1295 = vst.msk [vmem:[#allocation2 + $0x30] sm:$0xff] %vm1288, %v1280
      %v1296 = vrot.slane %v1134, 1
      %v1297 = vrot.slane %v1136, 2
      %v1298 = vor.u32 %v1296, %v1297
      %v1299 = vshrl.u32 %v1126, 16
      %v1301 = vrot.slane %v1299, 1
      %v1302 = vrot.slane %v1141, 2
      %v1303 = vor.u32 %v1301, %v1302
      %v1304 = vsel %vm464, %v1298, %v1303
      %v1305 = vrot.slane %v1146, 1
      %v1306 = vrot.slane %v1148, 2
      %v1307 = vor.u32 %v1305, %v1306
      %v1308 = vshrl.u32 %v1127, 16
      %v1310 = vrot.slane %v1308, 1
      %v1311 = vrot.slane %v1153, 2
      %v1312 = vor.u32 %v1310, %v1311
      %v1313 = vsel %vm464, %v1307, %v1312
      %v1314 = vrot.slane %v1158, 1
      %v1315 = vrot.slane %v1160, 2
      %v1316 = vor.u32 %v1314, %v1315
      %v1317 = vshrl.u32 %v1128, 16
      %v1319 = vrot.slane %v1317, 1
      %v1320 = vrot.slane %v1165, 2
      %v1321 = vor.u32 %v1319, %v1320
      %v1322 = vsel %vm464, %v1316, %v1321
      %v1323 = vrot.slane %v1170, 1
      %v1324 = vrot.slane %v1172, 2
      %v1325 = vor.u32 %v1323, %v1324
      %v1326 = vshrl.u32 %v1129, 16
      %v1328 = vrot.slane %v1326, 1
      %v1329 = vrot.slane %v1177, 2
      %v1330 = vor.u32 %v1328, %v1329
      %v1331 = vsel %vm464, %v1325, %v1330
      %v1332 = vrot.slane %v1182, 1
      %v1333 = vrot.slane %v1184, 2
      %v1334 = vor.u32 %v1332, %v1333
      %v1335 = vshrl.u32 %v1130, 16
      %v1337 = vrot.slane %v1335, 1
      %v1338 = vrot.slane %v1189, 2
      %v1339 = vor.u32 %v1337, %v1338
      %v1340 = vsel %vm464, %v1334, %v1339
      %v1341 = vrot.slane %v1194, 1
      %v1342 = vrot.slane %v1196, 2
      %v1343 = vor.u32 %v1341, %v1342
      %v1344 = vshrl.u32 %v1131, 16
      %v1346 = vrot.slane %v1344, 1
      %v1347 = vrot.slane %v1201, 2
      %v1348 = vor.u32 %v1346, %v1347
      %v1349 = vsel %vm464, %v1343, %v1348
      %v1350 = vrot.slane %v1206, 1
      %v1351 = vrot.slane %v1208, 2
      %v1352 = vor.u32 %v1350, %v1351
      %v1353 = vshrl.u32 %v1132, 16
      %v1355 = vrot.slane %v1353, 1
      %v1356 = vrot.slane %v1213, 2
      %v1357 = vor.u32 %v1355, %v1356
      %v1358 = vsel %vm464, %v1352, %v1357
      %1359 = vrot.lane.b32.xlu0 %v1304, 39
      %v1360 = vpop.permute.xlu0 %1359
      %1361 = vrot.lane.b32.xlu0 %v1313, 39
      %v1362 = vpop.permute.xlu0 %1361
      %1363 = vrot.lane.b32.xlu0 %v1322, 39
      %v1364 = vpop.permute.xlu0 %1363
      %1365 = vrot.lane.b32.xlu0 %v1331, 39
      %v1366 = vpop.permute.xlu0 %1365
      %1367 = vrot.lane.b32.xlu0 %v1340, 39
      %v1368 = vpop.permute.xlu0 %1367
      %1369 = vrot.lane.b32.xlu0 %v1349, 39
      %v1370 = vpop.permute.xlu0 %1369
      %1371 = vrot.lane.b32.xlu0 %v1358, 39
      %v1372 = vpop.permute.xlu0 %1371
      %vm1380 = vcmask 343352
      %1381 = vst.msk [vmem:[#allocation2] sm:$0xff] %vm1380, %v1360
      %1382 = vst.msk [vmem:[#allocation2 + $0x8] sm:$0xff] %vm1380, %v1362
      %1383 = vst.msk [vmem:[#allocation2 + $0x10] sm:$0xff] %vm1380, %v1364
      %1384 = vst.msk [vmem:[#allocation2 + $0x18] sm:$0xff] %vm1380, %v1366
      %1385 = vst.msk [vmem:[#allocation2 + $0x20] sm:$0xff] %vm1380, %v1368
      %1386 = vst.msk [vmem:[#allocation2 + $0x28] sm:$0xff] %vm1380, %v1370
      %1387 = vst.msk [vmem:[#allocation2 + $0x30] sm:$0xff] %vm1380, %v1372
      %v1388 = vrot.slane %v1076, 2
      %v1389 = vrot.slane %v1126, 2
      %v1390 = vsel %vm557, %v1388, %v1389
      %v1391 = vrot.slane %v1077, 2
      %v1392 = vrot.slane %v1127, 2
      %v1393 = vsel %vm557, %v1391, %v1392
      %v1394 = vrot.slane %v1078, 2
      %v1395 = vrot.slane %v1128, 2
      %v1396 = vsel %vm557, %v1394, %v1395
      %v1397 = vrot.slane %v1079, 2
      %v1398 = vrot.slane %v1129, 2
      %v1399 = vsel %vm557, %v1397, %v1398
      %v1400 = vrot.slane %v1080, 2
      %v1401 = vrot.slane %v1130, 2
      %v1402 = vsel %vm557, %v1400, %v1401
      %v1403 = vrot.slane %v1081, 2
      %v1404 = vrot.slane %v1131, 2
      %v1405 = vsel %vm557, %v1403, %v1404
      %v1406 = vrot.slane %v1082, 2
      %v1407 = vrot.slane %v1132, 2
      %v1408 = vsel %vm557, %v1406, %v1407
      %1409 = vrot.lane.b32.xlu0 %v1390, 42
      %v1410 = vpop.permute.xlu0 %1409
      %1411 = vrot.lane.b32.xlu0 %v1393, 42
      %v1412 = vpop.permute.xlu0 %1411
      %1413 = vrot.lane.b32.xlu0 %v1396, 42
      %v1414 = vpop.permute.xlu0 %1413
      %1415 = vrot.lane.b32.xlu0 %v1399, 42
      %v1416 = vpop.permute.xlu0 %1415
      %1417 = vrot.lane.b32.xlu0 %v1402, 42
      %v1418 = vpop.permute.xlu0 %1417
      %1419 = vrot.lane.b32.xlu0 %v1405, 42
      %v1420 = vpop.permute.xlu0 %1419
      %1421 = vrot.lane.b32.xlu0 %v1408, 42
      %v1422 = vpop.permute.xlu0 %1421
      %vm1430 = vcmask 367952
      %1431 = vst.msk [vmem:[#allocation2] sm:$0xff] %vm1430, %v1410
      %1432 = vst.msk [vmem:[#allocation2 + $0x8] sm:$0xff] %vm1430, %v1412
      %1433 = vst.msk [vmem:[#allocation2 + $0x10] sm:$0xff] %vm1430, %v1414
      %1434 = vst.msk [vmem:[#allocation2 + $0x18] sm:$0xff] %vm1430, %v1416
      %1435 = vst.msk [vmem:[#allocation2 + $0x20] sm:$0xff] %vm1430, %v1418
      %1436 = vst.msk [vmem:[#allocation2 + $0x28] sm:$0xff] %vm1430, %v1420
      %1437 = vst.msk [vmem:[#allocation2 + $0x30] sm:$0xff] %vm1430, %v1422
      %s1438 = sadd.s32 %s195, 3
      %s1439 = smul.u32 %s1438, 3
      %s1440 = smul.addr %s1439, 4
      %s1441 = scalar_lea.vmem %s183, %s1440
      %v1442 = vld [vmem:[%s1441] sm:$0xf]
      %v1443 = vld [vmem:[%s1441 + $0x4] sm:$0xf]
      %v1444 = vld [vmem:[%s1441 + $0x8] sm:$0x3]
      %v1445 = vld [vmem:[%s1441 + $0xc] sm:$0xf]
      %v1446 = vld [vmem:[%s1441 + $0x10] sm:$0xf]
      %v1447 = vld [vmem:[%s1441 + $0x14] sm:$0x3]
      %v1448 = vld [vmem:[%s1441 + $0x18] sm:$0xf]
      %v1449 = vld [vmem:[%s1441 + $0x1c] sm:$0xf]
      %v1450 = vld [vmem:[%s1441 + $0x20] sm:$0x3]
      %v1451 = vld [vmem:[%s1441 + $0x24] sm:$0xf]
      %v1452 = vld [vmem:[%s1441 + $0x28] sm:$0xf]
      %v1453 = vld [vmem:[%s1441 + $0x2c] sm:$0x3]
      %v1454 = vld [vmem:[%s1441 + $0x30] sm:$0xf]
      %v1455 = vld [vmem:[%s1441 + $0x34] sm:$0xf]
      %v1456 = vld [vmem:[%s1441 + $0x38] sm:$0x3]
      %v1457 = vld [vmem:[%s1441 + $0x3c] sm:$0xf]
      %v1458 = vld [vmem:[%s1441 + $0x40] sm:$0xf]
      %v1459 = vld [vmem:[%s1441 + $0x44] sm:$0x3]
      %v1460 = vld [vmem:[%s1441 + $0x48] sm:$0xf]
      %v1461 = vld [vmem:[%s1441 + $0x4c] sm:$0xf]
      %v1462 = vld [vmem:[%s1441 + $0x50] sm:$0x3]
      %v1477 = vunpack.c.l.b16 %v1442
      %v1478 = vunpack.c.l.b16 %v1443
      %v1479 = vunpack.c.l.b16 %v1445
      %v1480 = vunpack.c.l.b16 %v1446
      %v1481 = vunpack.c.l.b16 %v1448
      %v1482 = vunpack.c.l.b16 %v1449
      %v1483 = vunpack.c.l.b16 %v1451
      %v1484 = vunpack.c.l.b16 %v1452
      %v1485 = vunpack.c.l.b16 %v1454
      %v1486 = vunpack.c.l.b16 %v1455
      %v1487 = vunpack.c.l.b16 %v1457
      %v1488 = vunpack.c.l.b16 %v1458
      %v1489 = vunpack.c.l.b16 %v1460
      %v1490 = vunpack.c.l.b16 %v1461
      %v1491 = vpack.c.b16 %v1478, %v1477
      %v1492 = vpack.c.b16 %v1480, %v1479
      %v1493 = vpack.c.b16 %v1482, %v1481
      %v1494 = vpack.c.b16 %v1484, %v1483
      %v1495 = vpack.c.b16 %v1486, %v1485
      %v1496 = vpack.c.b16 %v1488, %v1487
      %v1497 = vpack.c.b16 %v1490, %v1489
      %1498 = vrot.lane.b32.xlu0 %v1491, 45
      %v1499 = vpop.permute.xlu0 %1498
      %1500 = vrot.lane.b32.xlu0 %v1492, 45
      %v1501 = vpop.permute.xlu0 %1500
      %1502 = vrot.lane.b32.xlu0 %v1493, 45
      %v1503 = vpop.permute.xlu0 %1502
      %1504 = vrot.lane.b32.xlu0 %v1494, 45
      %v1505 = vpop.permute.xlu0 %1504
      %1506 = vrot.lane.b32.xlu0 %v1495, 45
      %v1507 = vpop.permute.xlu0 %1506
      %1508 = vrot.lane.b32.xlu0 %v1496, 45
      %v1509 = vpop.permute.xlu0 %1508
      %1510 = vrot.lane.b32.xlu0 %v1497, 45
      %v1511 = vpop.permute.xlu0 %1510
      %vm1519 = vcmask 392552
      %1520 = vst.msk [vmem:[#allocation2] sm:$0xff] %vm1519, %v1499
      %1521 = vst.msk [vmem:[#allocation2 + $0x8] sm:$0xff] %vm1519, %v1501
      %1522 = vst.msk [vmem:[#allocation2 + $0x10] sm:$0xff] %vm1519, %v1503
      %1523 = vst.msk [vmem:[#allocation2 + $0x18] sm:$0xff] %vm1519, %v1505
      %1524 = vst.msk [vmem:[#allocation2 + $0x20] sm:$0xff] %vm1519, %v1507
      %1525 = vst.msk [vmem:[#allocation2 + $0x28] sm:$0xff] %vm1519, %v1509
      %1526 = vst.msk [vmem:[#allocation2 + $0x30] sm:$0xff] %vm1519, %v1511
      %v1534 = vunpack.c.l.b16 %v1444
      %v1535 = vunpack.c.l.b16 %v1447
      %v1536 = vunpack.c.l.b16 %v1450
      %v1537 = vunpack.c.l.b16 %v1453
      %v1538 = vunpack.c.l.b16 %v1456
      %v1539 = vunpack.c.l.b16 %v1459
      %v1540 = vunpack.c.l.b16 %v1462
      %v1541 = vpack.c.b16 %v1534, %v1534
      %v1542 = vpack.c.b16 %v1535, %v1535
      %v1543 = vpack.c.b16 %v1536, %v1536
      %v1544 = vpack.c.b16 %v1537, %v1537
      %v1545 = vpack.c.b16 %v1538, %v1538
      %v1546 = vpack.c.b16 %v1539, %v1539
      %v1547 = vpack.c.b16 %v1540, %v1540
      %v1549 = vshrl.u32 %v1491, 16
      %v1551 = vshll.u32 %v1491, 16
      %v1553 = vrot.slane %v1551, 1
      %v1554 = vor.u32 %v1549, %v1553
      %v1556 = vshll.u32 %v1541, 16
      %v1558 = vrot.slane %v1556, 1
      %v1559 = vsel %vm299, %v1554, %v1558
      %v1561 = vshrl.u32 %v1492, 16
      %v1563 = vshll.u32 %v1492, 16
      %v1565 = vrot.slane %v1563, 1
      %v1566 = vor.u32 %v1561, %v1565
      %v1568 = vshll.u32 %v1542, 16
      %v1570 = vrot.slane %v1568, 1
      %v1571 = vsel %vm299, %v1566, %v1570
      %v1573 = vshrl.u32 %v1493, 16
      %v1575 = vshll.u32 %v1493, 16
      %v1577 = vrot.slane %v1575, 1
      %v1578 = vor.u32 %v1573, %v1577
      %v1580 = vshll.u32 %v1543, 16
      %v1582 = vrot.slane %v1580, 1
      %v1583 = vsel %vm299, %v1578, %v1582
      %v1585 = vshrl.u32 %v1494, 16
      %v1587 = vshll.u32 %v1494, 16
      %v1589 = vrot.slane %v1587, 1
      %v1590 = vor.u32 %v1585, %v1589
      %v1592 = vshll.u32 %v1544, 16
      %v1594 = vrot.slane %v1592, 1
      %v1595 = vsel %vm299, %v1590, %v1594
      %v1597 = vshrl.u32 %v1495, 16
      %v1599 = vshll.u32 %v1495, 16
      %v1601 = vrot.slane %v1599, 1
      %v1602 = vor.u32 %v1597, %v1601
      %v1604 = vshll.u32 %v1545, 16
      %v1606 = vrot.slane %v1604, 1
      %v1607 = vsel %vm299, %v1602, %v1606
      %v1609 = vshrl.u32 %v1496, 16
      %v1611 = vshll.u32 %v1496, 16
      %v1613 = vrot.slane %v1611, 1
      %v1614 = vor.u32 %v1609, %v1613
      %v1616 = vshll.u32 %v1546, 16
      %v1618 = vrot.slane %v1616, 1
      %v1619 = vsel %vm299, %v1614, %v1618
      %v1621 = vshrl.u32 %v1497, 16
      %v1623 = vshll.u32 %v1497, 16
      %v1625 = vrot.slane %v1623, 1
      %v1626 = vor.u32 %v1621, %v1625
      %v1628 = vshll.u32 %v1547, 16
      %v1630 = vrot.slane %v1628, 1
      %v1631 = vsel %vm299, %v1626, %v1630
      %1632 = vrot.lane.b32.xlu0 %v1559, 48
      %v1633 = vpop.permute.xlu0 %1632
      %1634 = vrot.lane.b32.xlu0 %v1571, 48
      %v1635 = vpop.permute.xlu0 %1634
      %1636 = vrot.lane.b32.xlu0 %v1583, 48
      %v1637 = vpop.permute.xlu0 %1636
      %1638 = vrot.lane.b32.xlu0 %v1595, 48
      %v1639 = vpop.permute.xlu0 %1638
      %1640 = vrot.lane.b32.xlu0 %v1607, 48
      %v1641 = vpop.permute.xlu0 %1640
      %1642 = vrot.lane.b32.xlu0 %v1619, 48
      %v1643 = vpop.permute.xlu0 %1642
      %1644 = vrot.lane.b32.xlu0 %v1631, 48
      %v1645 = vpop.permute.xlu0 %1644
      %vm1653 = vcmask 417152
      %1654 = vst.msk [vmem:[#allocation2] sm:$0xff] %vm1653, %v1633
      %1655 = vst.msk [vmem:[#allocation2 + $0x8] sm:$0xff] %vm1653, %v1635
      %1656 = vst.msk [vmem:[#allocation2 + $0x10] sm:$0xff] %vm1653, %v1637
      %1657 = vst.msk [vmem:[#allocation2 + $0x18] sm:$0xff] %vm1653, %v1639
      %1658 = vst.msk [vmem:[#allocation2 + $0x20] sm:$0xff] %vm1653, %v1641
      %1659 = vst.msk [vmem:[#allocation2 + $0x28] sm:$0xff] %vm1653, %v1643
      %1660 = vst.msk [vmem:[#allocation2 + $0x30] sm:$0xff] %vm1653, %v1645
      %v1661 = vrot.slane %v1491, 1
      %v1662 = vrot.slane %v1541, 1
      %v1663 = vsel %vm413, %v1661, %v1662
      %v1664 = vrot.slane %v1492, 1
      %v1665 = vrot.slane %v1542, 1
      %v1666 = vsel %vm413, %v1664, %v1665
      %v1667 = vrot.slane %v1493, 1
      %v1668 = vrot.slane %v1543, 1
      %v1669 = vsel %vm413, %v1667, %v1668
      %v1670 = vrot.slane %v1494, 1
      %v1671 = vrot.slane %v1544, 1
      %v1672 = vsel %vm413, %v1670, %v1671
      %v1673 = vrot.slane %v1495, 1
      %v1674 = vrot.slane %v1545, 1
      %v1675 = vsel %vm413, %v1673, %v1674
      %v1676 = vrot.slane %v1496, 1
      %v1677 = vrot.slane %v1546, 1
      %v1678 = vsel %vm413, %v1676, %v1677
      %v1679 = vrot.slane %v1497, 1
      %v1680 = vrot.slane %v1547, 1
      %v1681 = vsel %vm413, %v1679, %v1680
      %1682 = vrot.lane.b32.xlu0 %v1663, 51
      %v1683 = vpop.permute.xlu0 %1682
      %1684 = vrot.lane.b32.xlu0 %v1666, 51
      %v1685 = vpop.permute.xlu0 %1684
      %1686 = vrot.lane.b32.xlu0 %v1669, 51
      %v1687 = vpop.permute.xlu0 %1686
      %1688 = vrot.lane.b32.xlu0 %v1672, 51
      %v1689 = vpop.permute.xlu0 %1688
      %1690 = vrot.lane.b32.xlu0 %v1675, 51
      %v1691 = vpop.permute.xlu0 %1690
      %1692 = vrot.lane.b32.xlu0 %v1678, 51
      %v1693 = vpop.permute.xlu0 %1692
      %1694 = vrot.lane.b32.xlu0 %v1681, 51
      %v1695 = vpop.permute.xlu0 %1694
      %vm1703 = vcmask 441752
      %1704 = vst.msk [vmem:[#allocation2] sm:$0xff] %vm1703, %v1683
      %1705 = vst.msk [vmem:[#allocation2 + $0x8] sm:$0xff] %vm1703, %v1685
      %1706 = vst.msk [vmem:[#allocation2 + $0x10] sm:$0xff] %vm1703, %v1687
      %1707 = vst.msk [vmem:[#allocation2 + $0x18] sm:$0xff] %vm1703, %v1689
      %1708 = vst.msk [vmem:[#allocation2 + $0x20] sm:$0xff] %vm1703, %v1691
      %1709 = vst.msk [vmem:[#allocation2 + $0x28] sm:$0xff] %vm1703, %v1693
      %1710 = vst.msk [vmem:[#allocation2 + $0x30] sm:$0xff] %vm1703, %v1695
      %v1711 = vrot.slane %v1549, 1
      %v1712 = vrot.slane %v1551, 2
      %v1713 = vor.u32 %v1711, %v1712
      %v1714 = vshrl.u32 %v1541, 16
      %v1716 = vrot.slane %v1714, 1
      %v1717 = vrot.slane %v1556, 2
      %v1718 = vor.u32 %v1716, %v1717
      %v1719 = vsel %vm464, %v1713, %v1718
      %v1720 = vrot.slane %v1561, 1
      %v1721 = vrot.slane %v1563, 2
      %v1722 = vor.u32 %v1720, %v1721
      %v1723 = vshrl.u32 %v1542, 16
      %v1725 = vrot.slane %v1723, 1
      %v1726 = vrot.slane %v1568, 2
      %v1727 = vor.u32 %v1725, %v1726
      %v1728 = vsel %vm464, %v1722, %v1727
      %v1729 = vrot.slane %v1573, 1
      %v1730 = vrot.slane %v1575, 2
      %v1731 = vor.u32 %v1729, %v1730
      %v1732 = vshrl.u32 %v1543, 16
      %v1734 = vrot.slane %v1732, 1
      %v1735 = vrot.slane %v1580, 2
      %v1736 = vor.u32 %v1734, %v1735
      %v1737 = vsel %vm464, %v1731, %v1736
      %v1738 = vrot.slane %v1585, 1
      %v1739 = vrot.slane %v1587, 2
      %v1740 = vor.u32 %v1738, %v1739
      %v1741 = vshrl.u32 %v1544, 16
      %v1743 = vrot.slane %v1741, 1
      %v1744 = vrot.slane %v1592, 2
      %v1745 = vor.u32 %v1743, %v1744
      %v1746 = vsel %vm464, %v1740, %v1745
      %v1747 = vrot.slane %v1597, 1
      %v1748 = vrot.slane %v1599, 2
      %v1749 = vor.u32 %v1747, %v1748
      %v1750 = vshrl.u32 %v1545, 16
      %v1752 = vrot.slane %v1750, 1
      %v1753 = vrot.slane %v1604, 2
      %v1754 = vor.u32 %v1752, %v1753
      %v1755 = vsel %vm464, %v1749, %v1754
      %v1756 = vrot.slane %v1609, 1
      %v1757 = vrot.slane %v1611, 2
      %v1758 = vor.u32 %v1756, %v1757
      %v1759 = vshrl.u32 %v1546, 16
      %v1761 = vrot.slane %v1759, 1
      %v1762 = vrot.slane %v1616, 2
      %v1763 = vor.u32 %v1761, %v1762
      %v1764 = vsel %vm464, %v1758, %v1763
      %v1765 = vrot.slane %v1621, 1
      %v1766 = vrot.slane %v1623, 2
      %v1767 = vor.u32 %v1765, %v1766
      %v1768 = vshrl.u32 %v1547, 16
      %v1770 = vrot.slane %v1768, 1
      %v1771 = vrot.slane %v1628, 2
      %v1772 = vor.u32 %v1770, %v1771
      %v1773 = vsel %vm464, %v1767, %v1772
      %1774 = vrot.lane.b32.xlu0 %v1719, 54
      %v1775 = vpop.permute.xlu0 %1774
      %1776 = vrot.lane.b32.xlu0 %v1728, 54
      %v1777 = vpop.permute.xlu0 %1776
      %1778 = vrot.lane.b32.xlu0 %v1737, 54
      %v1779 = vpop.permute.xlu0 %1778
      %1780 = vrot.lane.b32.xlu0 %v1746, 54
      %v1781 = vpop.permute.xlu0 %1780
      %1782 = vrot.lane.b32.xlu0 %v1755, 54
      %v1783 = vpop.permute.xlu0 %1782
      %1784 = vrot.lane.b32.xlu0 %v1764, 54
      %v1785 = vpop.permute.xlu0 %1784
      %1786 = vrot.lane.b32.xlu0 %v1773, 54
      %v1787 = vpop.permute.xlu0 %1786
      %vm1795 = vcmask 466352
      %1796 = vst.msk [vmem:[#allocation2] sm:$0xff] %vm1795, %v1775
      %1797 = vst.msk [vmem:[#allocation2 + $0x8] sm:$0xff] %vm1795, %v1777
      %1798 = vst.msk [vmem:[#allocation2 + $0x10] sm:$0xff] %vm1795, %v1779
      %1799 = vst.msk [vmem:[#allocation2 + $0x18] sm:$0xff] %vm1795, %v1781
      %1800 = vst.msk [vmem:[#allocation2 + $0x20] sm:$0xff] %vm1795, %v1783
      %1801 = vst.msk [vmem:[#allocation2 + $0x28] sm:$0xff] %vm1795, %v1785
      %1802 = vst.msk [vmem:[#allocation2 + $0x30] sm:$0xff] %vm1795, %v1787
      %v1803 = vrot.slane %v1491, 2
      %v1804 = vrot.slane %v1541, 2
      %v1805 = vsel %vm557, %v1803, %v1804
      %v1806 = vrot.slane %v1492, 2
      %v1807 = vrot.slane %v1542, 2
      %v1808 = vsel %vm557, %v1806, %v1807
      %v1809 = vrot.slane %v1493, 2
      %v1810 = vrot.slane %v1543, 2
      %v1811 = vsel %vm557, %v1809, %v1810
      %v1812 = vrot.slane %v1494, 2
      %v1813 = vrot.slane %v1544, 2
      %v1814 = vsel %vm557, %v1812, %v1813
      %v1815 = vrot.slane %v1495, 2
      %v1816 = vrot.slane %v1545, 2
      %v1817 = vsel %vm557, %v1815, %v1816
      %v1818 = vrot.slane %v1496, 2
      %v1819 = vrot.slane %v1546, 2
      %v1820 = vsel %vm557, %v1818, %v1819
      %v1821 = vrot.slane %v1497, 2
      %v1822 = vrot.slane %v1547, 2
      %v1823 = vsel %vm557, %v1821, %v1822
      %1824 = vrot.lane.b32.xlu0 %v1805, 57
      %v1825 = vpop.permute.xlu0 %1824
      %1826 = vrot.lane.b32.xlu0 %v1808, 57
      %v1827 = vpop.permute.xlu0 %1826
      %1828 = vrot.lane.b32.xlu0 %v1811, 57
      %v1829 = vpop.permute.xlu0 %1828
      %1830 = vrot.lane.b32.xlu0 %v1814, 57
      %v1831 = vpop.permute.xlu0 %1830
      %1832 = vrot.lane.b32.xlu0 %v1817, 57
      %v1833 = vpop.permute.xlu0 %1832
      %1834 = vrot.lane.b32.xlu0 %v1820, 57
      %v1835 = vpop.permute.xlu0 %1834
      %1836 = vrot.lane.b32.xlu0 %v1823, 57
      %v1837 = vpop.permute.xlu0 %1836
      %vm1845 = vcmask 490952
      %1846 = vst.msk [vmem:[#allocation2] sm:$0xff] %vm1845, %v1825
      %1847 = vst.msk [vmem:[#allocation2 + $0x8] sm:$0xff] %vm1845, %v1827
      %1848 = vst.msk [vmem:[#allocation2 + $0x10] sm:$0xff] %vm1845, %v1829
      %1849 = vst.msk [vmem:[#allocation2 + $0x18] sm:$0xff] %vm1845, %v1831
      %1850 = vst.msk [vmem:[#allocation2 + $0x20] sm:$0xff] %vm1845, %v1833
      %1851 = vst.msk [vmem:[#allocation2 + $0x28] sm:$0xff] %vm1845, %v1835
      %1852 = vst.msk [vmem:[#allocation2 + $0x30] sm:$0xff] %vm1845, %v1837
      %s1853 = sadd.s32 %s195, 4
      %s1854 = smul.u32 %s1853, 3
      %s1855 = smul.addr %s1854, 4
      %s1856 = scalar_lea.vmem %s183, %s1855
      %v1857 = vld [vmem:[%s1856] sm:$0xf]
      %v1858 = vld [vmem:[%s1856 + $0x4] sm:$0xf]
      %v1859 = vld [vmem:[%s1856 + $0x8] sm:$0x3]
      %v1860 = vld [vmem:[%s1856 + $0xc] sm:$0xf]
      %v1861 = vld [vmem:[%s1856 + $0x10] sm:$0xf]
      %v1862 = vld [vmem:[%s1856 + $0x14] sm:$0x3]
      %v1863 = vld [vmem:[%s1856 + $0x18] sm:$0xf]
      %v1864 = vld [vmem:[%s1856 + $0x1c] sm:$0xf]
      %v1865 = vld [vmem:[%s1856 + $0x20] sm:$0x3]
      %v1866 = vld [vmem:[%s1856 + $0x24] sm:$0xf]
      %v1867 = vld [vmem:[%s1856 + $0x28] sm:$0xf]
      %v1868 = vld [vmem:[%s1856 + $0x2c] sm:$0x3]
      %v1869 = vld [vmem:[%s1856 + $0x30] sm:$0xf]
      %v1870 = vld [vmem:[%s1856 + $0x34] sm:$0xf]
      %v1871 = vld [vmem:[%s1856 + $0x38] sm:$0x3]
      %v1872 = vld [vmem:[%s1856 + $0x3c] sm:$0xf]
      %v1873 = vld [vmem:[%s1856 + $0x40] sm:$0xf]
      %v1874 = vld [vmem:[%s1856 + $0x44] sm:$0x3]
      %v1875 = vld [vmem:[%s1856 + $0x48] sm:$0xf]
      %v1876 = vld [vmem:[%s1856 + $0x4c] sm:$0xf]
      %v1877 = vld [vmem:[%s1856 + $0x50] sm:$0x3]
      %v1892 = vunpack.c.l.b16 %v1857
      %v1893 = vunpack.c.l.b16 %v1858
      %v1894 = vunpack.c.l.b16 %v1860
      %v1895 = vunpack.c.l.b16 %v1861
      %v1896 = vunpack.c.l.b16 %v1863
      %v1897 = vunpack.c.l.b16 %v1864
      %v1898 = vunpack.c.l.b16 %v1866
      %v1899 = vunpack.c.l.b16 %v1867
      %v1900 = vunpack.c.l.b16 %v1869
      %v1901 = vunpack.c.l.b16 %v1870
      %v1902 = vunpack.c.l.b16 %v1872
      %v1903 = vunpack.c.l.b16 %v1873
      %v1904 = vunpack.c.l.b16 %v1875
      %v1905 = vunpack.c.l.b16 %v1876
      %v1906 = vpack.c.b16 %v1893, %v1892
      %v1907 = vpack.c.b16 %v1895, %v1894
      %v1908 = vpack.c.b16 %v1897, %v1896
      %v1909 = vpack.c.b16 %v1899, %v1898
      %v1910 = vpack.c.b16 %v1901, %v1900
      %v1911 = vpack.c.b16 %v1903, %v1902
      %v1912 = vpack.c.b16 %v1905, %v1904
      %1913 = vrot.lane.b32.xlu0 %v1906, 60
      %v1914 = vpop.permute.xlu0 %1913
      %1915 = vrot.lane.b32.xlu0 %v1907, 60
      %v1916 = vpop.permute.xlu0 %1915
      %1917 = vrot.lane.b32.xlu0 %v1908, 60
      %v1918 = vpop.permute.xlu0 %1917
      %1919 = vrot.lane.b32.xlu0 %v1909, 60
      %v1920 = vpop.permute.xlu0 %1919
      %1921 = vrot.lane.b32.xlu0 %v1910, 60
      %v1922 = vpop.permute.xlu0 %1921
      %1923 = vrot.lane.b32.xlu0 %v1911, 60
      %v1924 = vpop.permute.xlu0 %1923
      %1925 = vrot.lane.b32.xlu0 %v1912, 60
      %v1926 = vpop.permute.xlu0 %1925
      %vm1934 = vcmask 515552
      %1935 = vst.msk [vmem:[#allocation2] sm:$0xff] %vm1934, %v1914
      %1936 = vst.msk [vmem:[#allocation2 + $0x8] sm:$0xff] %vm1934, %v1916
      %1937 = vst.msk [vmem:[#allocation2 + $0x10] sm:$0xff] %vm1934, %v1918
      %1938 = vst.msk [vmem:[#allocation2 + $0x18] sm:$0xff] %vm1934, %v1920
      %1939 = vst.msk [vmem:[#allocation2 + $0x20] sm:$0xff] %vm1934, %v1922
      %1940 = vst.msk [vmem:[#allocation2 + $0x28] sm:$0xff] %vm1934, %v1924
      %1941 = vst.msk [vmem:[#allocation2 + $0x30] sm:$0xff] %vm1934, %v1926
      %v1949 = vunpack.c.l.b16 %v1859
      %v1950 = vunpack.c.l.b16 %v1862
      %v1951 = vunpack.c.l.b16 %v1865
      %v1952 = vunpack.c.l.b16 %v1868
      %v1953 = vunpack.c.l.b16 %v1871
      %v1954 = vunpack.c.l.b16 %v1874
      %v1955 = vunpack.c.l.b16 %v1877
      %v1956 = vpack.c.b16 %v1949, %v1949
      %v1957 = vpack.c.b16 %v1950, %v1950
      %v1958 = vpack.c.b16 %v1951, %v1951
      %v1959 = vpack.c.b16 %v1952, %v1952
      %v1960 = vpack.c.b16 %v1953, %v1953
      %v1961 = vpack.c.b16 %v1954, %v1954
      %v1962 = vpack.c.b16 %v1955, %v1955
      %v1964 = vshrl.u32 %v1906, 16
      %v1966 = vshll.u32 %v1906, 16
      %v1968 = vrot.slane %v1966, 1
      %v1969 = vor.u32 %v1964, %v1968
      %v1971 = vshll.u32 %v1956, 16
      %v1973 = vrot.slane %v1971, 1
      %v1974 = vsel %vm299, %v1969, %v1973
      %v1976 = vshrl.u32 %v1907, 16
      %v1978 = vshll.u32 %v1907, 16
      %v1980 = vrot.slane %v1978, 1
      %v1981 = vor.u32 %v1976, %v1980
      %v1983 = vshll.u32 %v1957, 16
      %v1985 = vrot.slane %v1983, 1
      %v1986 = vsel %vm299, %v1981, %v1985
      %v1988 = vshrl.u32 %v1908, 16
      %v1990 = vshll.u32 %v1908, 16
      %v1992 = vrot.slane %v1990, 1
      %v1993 = vor.u32 %v1988, %v1992
      %v1995 = vshll.u32 %v1958, 16
      %v1997 = vrot.slane %v1995, 1
      %v1998 = vsel %vm299, %v1993, %v1997
      %v2000 = vshrl.u32 %v1909, 16
      %v2002 = vshll.u32 %v1909, 16
      %v2004 = vrot.slane %v2002, 1
      %v2005 = vor.u32 %v2000, %v2004
      %v2007 = vshll.u32 %v1959, 16
      %v2009 = vrot.slane %v2007, 1
      %v2010 = vsel %vm299, %v2005, %v2009
      %v2012 = vshrl.u32 %v1910, 16
      %v2014 = vshll.u32 %v1910, 16
      %v2016 = vrot.slane %v2014, 1
      %v2017 = vor.u32 %v2012, %v2016
      %v2019 = vshll.u32 %v1960, 16
      %v2021 = vrot.slane %v2019, 1
      %v2022 = vsel %vm299, %v2017, %v2021
      %v2024 = vshrl.u32 %v1911, 16
      %v2026 = vshll.u32 %v1911, 16
      %v2028 = vrot.slane %v2026, 1
      %v2029 = vor.u32 %v2024, %v2028
      %v2031 = vshll.u32 %v1961, 16
      %v2033 = vrot.slane %v2031, 1
      %v2034 = vsel %vm299, %v2029, %v2033
      %v2036 = vshrl.u32 %v1912, 16
      %v2038 = vshll.u32 %v1912, 16
      %v2040 = vrot.slane %v2038, 1
      %v2041 = vor.u32 %v2036, %v2040
      %v2043 = vshll.u32 %v1962, 16
      %v2045 = vrot.slane %v2043, 1
      %v2046 = vsel %vm299, %v2041, %v2045
      %2047 = vrot.lane.b32.xlu0 %v1974, 63
      %v2048 = vpop.permute.xlu0 %2047
      %2049 = vrot.lane.b32.xlu0 %v1986, 63
      %v2050 = vpop.permute.xlu0 %2049
      %2051 = vrot.lane.b32.xlu0 %v1998, 63
      %v2052 = vpop.permute.xlu0 %2051
      %2053 = vrot.lane.b32.xlu0 %v2010, 63
      %v2054 = vpop.permute.xlu0 %2053
      %2055 = vrot.lane.b32.xlu0 %v2022, 63
      %v2056 = vpop.permute.xlu0 %2055
      %2057 = vrot.lane.b32.xlu0 %v2034, 63
      %v2058 = vpop.permute.xlu0 %2057
      %2059 = vrot.lane.b32.xlu0 %v2046, 63
      %v2060 = vpop.permute.xlu0 %2059
      %vm2068 = vcmask 540152
      %2069 = vst.msk [vmem:[#allocation2] sm:$0xff] %vm2068, %v2048
      %2070 = vst.msk [vmem:[#allocation2 + $0x8] sm:$0xff] %vm2068, %v2050
      %2071 = vst.msk [vmem:[#allocation2 + $0x10] sm:$0xff] %vm2068, %v2052
      %2072 = vst.msk [vmem:[#allocation2 + $0x18] sm:$0xff] %vm2068, %v2054
      %2073 = vst.msk [vmem:[#allocation2 + $0x20] sm:$0xff] %vm2068, %v2056
      %2074 = vst.msk [vmem:[#allocation2 + $0x28] sm:$0xff] %vm2068, %v2058
      %2075 = vst.msk [vmem:[#allocation2 + $0x30] sm:$0xff] %vm2068, %v2060
      %v2076 = vrot.slane %v1906, 1
      %v2077 = vrot.slane %v1956, 1
      %v2078 = vsel %vm413, %v2076, %v2077
      %v2079 = vrot.slane %v1907, 1
      %v2080 = vrot.slane %v1957, 1
      %v2081 = vsel %vm413, %v2079, %v2080
      %v2082 = vrot.slane %v1908, 1
      %v2083 = vrot.slane %v1958, 1
      %v2084 = vsel %vm413, %v2082, %v2083
      %v2085 = vrot.slane %v1909, 1
      %v2086 = vrot.slane %v1959, 1
      %v2087 = vsel %vm413, %v2085, %v2086
      %v2088 = vrot.slane %v1910, 1
      %v2089 = vrot.slane %v1960, 1
      %v2090 = vsel %vm413, %v2088, %v2089
      %v2091 = vrot.slane %v1911, 1
      %v2092 = vrot.slane %v1961, 1
      %v2093 = vsel %vm413, %v2091, %v2092
      %v2094 = vrot.slane %v1912, 1
      %v2095 = vrot.slane %v1962, 1
      %v2096 = vsel %vm413, %v2094, %v2095
      %2097 = vrot.lane.b32.xlu0 %v2078, 66
      %v2098 = vpop.permute.xlu0 %2097
      %2099 = vrot.lane.b32.xlu0 %v2081, 66
      %v2100 = vpop.permute.xlu0 %2099
      %2101 = vrot.lane.b32.xlu0 %v2084, 66
      %v2102 = vpop.permute.xlu0 %2101
      %2103 = vrot.lane.b32.xlu0 %v2087, 66
      %v2104 = vpop.permute.xlu0 %2103
      %2105 = vrot.lane.b32.xlu0 %v2090, 66
      %v2106 = vpop.permute.xlu0 %2105
      %2107 = vrot.lane.b32.xlu0 %v2093, 66
      %v2108 = vpop.permute.xlu0 %2107
      %2109 = vrot.lane.b32.xlu0 %v2096, 66
      %v2110 = vpop.permute.xlu0 %2109
      %vm2118 = vcmask 564752
      %2119 = vst.msk [vmem:[#allocation2] sm:$0xff] %vm2118, %v2098
      %2120 = vst.msk [vmem:[#allocation2 + $0x8] sm:$0xff] %vm2118, %v2100
      %2121 = vst.msk [vmem:[#allocation2 + $0x10] sm:$0xff] %vm2118, %v2102
      %2122 = vst.msk [vmem:[#allocation2 + $0x18] sm:$0xff] %vm2118, %v2104
      %2123 = vst.msk [vmem:[#allocation2 + $0x20] sm:$0xff] %vm2118, %v2106
      %2124 = vst.msk [vmem:[#allocation2 + $0x28] sm:$0xff] %vm2118, %v2108
      %2125 = vst.msk [vmem:[#allocation2 + $0x30] sm:$0xff] %vm2118, %v2110
      %v2126 = vrot.slane %v1964, 1
      %v2127 = vrot.slane %v1966, 2
      %v2128 = vor.u32 %v2126, %v2127
      %v2129 = vshrl.u32 %v1956, 16
      %v2131 = vrot.slane %v2129, 1
      %v2132 = vrot.slane %v1971, 2
      %v2133 = vor.u32 %v2131, %v2132
      %v2134 = vsel %vm464, %v2128, %v2133
      %v2135 = vrot.slane %v1976, 1
      %v2136 = vrot.slane %v1978, 2
      %v2137 = vor.u32 %v2135, %v2136
      %v2138 = vshrl.u32 %v1957, 16
      %v2140 = vrot.slane %v2138, 1
      %v2141 = vrot.slane %v1983, 2
      %v2142 = vor.u32 %v2140, %v2141
      %v2143 = vsel %vm464, %v2137, %v2142
      %v2144 = vrot.slane %v1988, 1
      %v2145 = vrot.slane %v1990, 2
      %v2146 = vor.u32 %v2144, %v2145
      %v2147 = vshrl.u32 %v1958, 16
      %v2149 = vrot.slane %v2147, 1
      %v2150 = vrot.slane %v1995, 2
      %v2151 = vor.u32 %v2149, %v2150
      %v2152 = vsel %vm464, %v2146, %v2151
      %v2153 = vrot.slane %v2000, 1
      %v2154 = vrot.slane %v2002, 2
      %v2155 = vor.u32 %v2153, %v2154
      %v2156 = vshrl.u32 %v1959, 16
      %v2158 = vrot.slane %v2156, 1
      %v2159 = vrot.slane %v2007, 2
      %v2160 = vor.u32 %v2158, %v2159
      %v2161 = vsel %vm464, %v2155, %v2160
      %v2162 = vrot.slane %v2012, 1
      %v2163 = vrot.slane %v2014, 2
      %v2164 = vor.u32 %v2162, %v2163
      %v2165 = vshrl.u32 %v1960, 16
      %v2167 = vrot.slane %v2165, 1
      %v2168 = vrot.slane %v2019, 2
      %v2169 = vor.u32 %v2167, %v2168
      %v2170 = vsel %vm464, %v2164, %v2169
      %v2171 = vrot.slane %v2024, 1
      %v2172 = vrot.slane %v2026, 2
      %v2173 = vor.u32 %v2171, %v2172
      %v2174 = vshrl.u32 %v1961, 16
      %v2176 = vrot.slane %v2174, 1
      %v2177 = vrot.slane %v2031, 2
      %v2178 = vor.u32 %v2176, %v2177
      %v2179 = vsel %vm464, %v2173, %v2178
      %v2180 = vrot.slane %v2036, 1
      %v2181 = vrot.slane %v2038, 2
      %v2182 = vor.u32 %v2180, %v2181
      %v2183 = vshrl.u32 %v1962, 16
      %v2185 = vrot.slane %v2183, 1
      %v2186 = vrot.slane %v2043, 2
      %v2187 = vor.u32 %v2185, %v2186
      %v2188 = vsel %vm464, %v2182, %v2187
      %2189 = vrot.lane.b32.xlu0 %v2134, 69
      %v2190 = vpop.permute.xlu0 %2189
      %2191 = vrot.lane.b32.xlu0 %v2143, 69
      %v2192 = vpop.permute.xlu0 %2191
      %2193 = vrot.lane.b32.xlu0 %v2152, 69
      %v2194 = vpop.permute.xlu0 %2193
      %2195 = vrot.lane.b32.xlu0 %v2161, 69
      %v2196 = vpop.permute.xlu0 %2195
      %2197 = vrot.lane.b32.xlu0 %v2170, 69
      %v2198 = vpop.permute.xlu0 %2197
      %2199 = vrot.lane.b32.xlu0 %v2179, 69
      %v2200 = vpop.permute.xlu0 %2199
      %2201 = vrot.lane.b32.xlu0 %v2188, 69
      %v2202 = vpop.permute.xlu0 %2201
      %vm2210 = vcmask 589352
      %2211 = vst.msk [vmem:[#allocation2] sm:$0xff] %vm2210, %v2190
      %2212 = vst.msk [vmem:[#allocation2 + $0x8] sm:$0xff] %vm2210, %v2192
      %2213 = vst.msk [vmem:[#allocation2 + $0x10] sm:$0xff] %vm2210, %v2194
      %2214 = vst.msk [vmem:[#allocation2 + $0x18] sm:$0xff] %vm2210, %v2196
      %2215 = vst.msk [vmem:[#allocation2 + $0x20] sm:$0xff] %vm2210, %v2198
      %2216 = vst.msk [vmem:[#allocation2 + $0x28] sm:$0xff] %vm2210, %v2200
      %2217 = vst.msk [vmem:[#allocation2 + $0x30] sm:$0xff] %vm2210, %v2202
      %v2218 = vrot.slane %v1906, 2
      %v2219 = vrot.slane %v1956, 2
      %v2220 = vsel %vm557, %v2218, %v2219
      %v2221 = vrot.slane %v1907, 2
      %v2222 = vrot.slane %v1957, 2
      %v2223 = vsel %vm557, %v2221, %v2222
      %v2224 = vrot.slane %v1908, 2
      %v2225 = vrot.slane %v1958, 2
      %v2226 = vsel %vm557, %v2224, %v2225
      %v2227 = vrot.slane %v1909, 2
      %v2228 = vrot.slane %v1959, 2
      %v2229 = vsel %vm557, %v2227, %v2228
      %v2230 = vrot.slane %v1910, 2
      %v2231 = vrot.slane %v1960, 2
      %v2232 = vsel %vm557, %v2230, %v2231
      %v2233 = vrot.slane %v1911, 2
      %v2234 = vrot.slane %v1961, 2
      %v2235 = vsel %vm557, %v2233, %v2234
      %v2236 = vrot.slane %v1912, 2
      %v2237 = vrot.slane %v1962, 2
      %v2238 = vsel %vm557, %v2236, %v2237
      %2239 = vrot.lane.b32.xlu0 %v2220, 72
      %v2240 = vpop.permute.xlu0 %2239
      %2241 = vrot.lane.b32.xlu0 %v2223, 72
      %v2242 = vpop.permute.xlu0 %2241
      %2243 = vrot.lane.b32.xlu0 %v2226, 72
      %v2244 = vpop.permute.xlu0 %2243
      %2245 = vrot.lane.b32.xlu0 %v2229, 72
      %v2246 = vpop.permute.xlu0 %2245
      %2247 = vrot.lane.b32.xlu0 %v2232, 72
      %v2248 = vpop.permute.xlu0 %2247
      %2249 = vrot.lane.b32.xlu0 %v2235, 72
      %v2250 = vpop.permute.xlu0 %2249
      %2251 = vrot.lane.b32.xlu0 %v2238, 72
      %v2252 = vpop.permute.xlu0 %2251
      %vm2260 = vcmask 613952
      %2261 = vst.msk [vmem:[#allocation2] sm:$0xff] %vm2260, %v2240
      %2262 = vst.msk [vmem:[#allocation2 + $0x8] sm:$0xff] %vm2260, %v2242
      %2263 = vst.msk [vmem:[#allocation2 + $0x10] sm:$0xff] %vm2260, %v2244
      %2264 = vst.msk [vmem:[#allocation2 + $0x18] sm:$0xff] %vm2260, %v2246
      %2265 = vst.msk [vmem:[#allocation2 + $0x20] sm:$0xff] %vm2260, %v2248
      %2266 = vst.msk [vmem:[#allocation2 + $0x28] sm:$0xff] %vm2260, %v2250
      %2267 = vst.msk [vmem:[#allocation2 + $0x30] sm:$0xff] %vm2260, %v2252
      %v2268 = vld [vmem:[#allocation2] sm:$0xff]
      %v2269 = vld [vmem:[#allocation2 + $0x8] sm:$0xff]
      %v2270 = vld [vmem:[#allocation2 + $0x10] sm:$0xff]
      %v2271 = vld [vmem:[#allocation2 + $0x18] sm:$0xff]
      %v2272 = vld [vmem:[#allocation2 + $0x20] sm:$0xff]
      %v2273 = vld [vmem:[#allocation2 + $0x28] sm:$0xff]
      %v2274 = vld [vmem:[#allocation2 + $0x30] sm:$0xff]
      %v2275 = vld [vmem:[%s1] sm:$0xf]
      %v2276 = vld [vmem:[%s1 + $0x4] sm:$0xf]
      %v2277 = vld [vmem:[%s1 + $0x8] sm:$0xf]
      %v2278 = vld [vmem:[%s1 + $0xc] sm:$0xf]
      %v2279 = vld [vmem:[%s1 + $0x10] sm:$0xf]
      %v2280 = vld [vmem:[%s1 + $0x14] sm:$0xf]
      %v2281 = vld [vmem:[%s1 + $0x18] sm:$0xf]
      %v2282 = vld [vmem:[%s1 + $0x1c] sm:$0xf]
      %v2283 = vld [vmem:[%s1 + $0x20] sm:$0xf]
      %v2284 = vld [vmem:[%s1 + $0x24] sm:$0xf]
      %v2285 = vld [vmem:[%s1 + $0x28] sm:$0xf]
      %v2286 = vld [vmem:[%s1 + $0x2c] sm:$0xf]
      %v2287 = vld [vmem:[%s1 + $0x30] sm:$0xf]
      %v2288 = vld [vmem:[%s1 + $0x34] sm:$0xf]
      %v2289 = vld [vmem:[%s1 + $0x38] sm:$0xf]
      %v2290 = vld [vmem:[%s1 + $0x3c] sm:$0xf]
      %v2291 = vld [vmem:[%s2] sm:$0x1]
      %v2293 = vlaneseq
      %v2294 = vshrl.u32 %v2293, 7
      %v2295 = vsub.s32 0, %v2294
      %v2296 = vrot.slane %v2291, %v2295
      %v2314 = vunpack.c.l.b16 %v2275
      %v2315 = vunpack.c.l.b16 %v2276
      %v2316 = vunpack.c.l.b16 %v2277
      %v2317 = vunpack.c.l.b16 %v2278
      %v2318 = vunpack.c.l.b16 %v2279
      %v2319 = vunpack.c.l.b16 %v2280
      %v2320 = vunpack.c.l.b16 %v2281
      %v2321 = vunpack.c.l.b16 %v2282
      %v2322 = vunpack.c.l.b16 %v2283
      %v2323 = vunpack.c.l.b16 %v2284
      %v2324 = vunpack.c.l.b16 %v2285
      %v2325 = vunpack.c.l.b16 %v2286
      %v2326 = vunpack.c.l.b16 %v2287
      %v2327 = vunpack.c.l.b16 %v2288
      %v2328 = vunpack.c.l.b16 %v2289
      %v2329 = vunpack.c.l.b16 %v2290
      %v2330 = vpack.c.b16 %v2315, %v2314
      %v2331 = vpack.c.b16 %v2317, %v2316
      %v2332 = vpack.c.b16 %v2319, %v2318
      %v2333 = vpack.c.b16 %v2321, %v2320
      %v2334 = vpack.c.b16 %v2323, %v2322
      %v2335 = vpack.c.b16 %v2325, %v2324
      %v2336 = vpack.c.b16 %v2327, %v2326
      %v2337 = vpack.c.b16 %v2329, %v2328
      %2346 = vmatprep.subr.bf16.mxu0 0
      %2347 = vmatpush1.bf16.msra.mxu0 %v2330
      %2348 = vmatprep.subr.bf16.mxu0 0
      %2349 = vmatpush1.bf16.msra.mxu0 %v2331
      %2350 = vmatprep.subr.bf16.mxu0 0
      %2351 = vmatpush1.bf16.msra.mxu0 %v2332
      %2352 = vmatprep.subr.bf16.mxu0 0
      %2353 = vmatpush1.bf16.msra.mxu0 %v2333
      %2354 = vmatprep.subr.bf16.mxu0 0
      %2355 = vmatpush1.bf16.msra.mxu0 %v2334
      %2356 = vmatprep.subr.bf16.mxu0 0
      %2357 = vmatpush1.bf16.msra.mxu0 %v2335
      %2358 = vmatprep.subr.bf16.mxu0 0
      %2359 = vmatpush1.bf16.msra.mxu0 %v2336
      %2360 = vmatprep.subr.bf16.mxu0 0
      %2361 = vmatpush1.bf16.msra.mxu0 %v2337
      %2362 = vmatprep.subr.bf16.mxu0 0
      %2363 = vmatpush1.bf16.msra.mxu0 0
      %2364 = vmatprep.subr.bf16.mxu0 0
      %2365 = vmatpush1.bf16.msra.mxu0 0
      %2366 = vmatprep.subr.bf16.mxu0 0
      %2367 = vmatpush1.bf16.msra.mxu0 0
      %2368 = vmatprep.subr.bf16.mxu0 0
      %2369 = vmatpush1.bf16.msra.mxu0 0
      %2370 = vmatprep.subr.bf16.mxu0 0
      %2371 = vmatpush1.bf16.msra.mxu0 0
      %2372 = vmatprep.subr.bf16.mxu0 0
      %2373 = vmatpush1.bf16.msra.mxu0 0
      %2374 = vmatprep.subr.bf16.mxu0 0
      %2375 = vmatpush1.bf16.msra.mxu0 0
      %2376 = vmatprep.subr.bf16.mxu0 0
      %2377 = vmatpush1.bf16.msra.mxu0 0
      %2378 = vmatprep.mubr.bf16.mxu0 0
      %2379 = vmatmul.mubr.bf16.gmra.mrb[0].mxu0 %v2268
      %v2380 = vpop.f32.mrb[0].mxu0
      %v2381 = vadd.f32 %v2296, %v2380
      %v2382 = vpop.f32.mrb[0].mxu0
      %v2383 = vpop.f32.mrb[0].mxu0
      %v2384 = vadd.f32 %v2296, %v2383
      %v2385 = vpop.f32.mrb[0].mxu0
      %2386 = vmatprep.mubr.bf16.mxu0 0
      %2387 = vmatmul.mubr.bf16.gmra.mrb[0].mxu0 %v2269
      %v2388 = vpop.f32.mrb[0].mxu0
      %v2389 = vadd.f32 %v2296, %v2388
      %v2390 = vpop.f32.mrb[0].mxu0
      %v2391 = vpop.f32.mrb[0].mxu0
      %v2392 = vadd.f32 %v2296, %v2391
      %v2393 = vpop.f32.mrb[0].mxu0
      %2394 = vmatprep.mubr.bf16.mxu0 0
      %2395 = vmatmul.mubr.bf16.gmra.mrb[0].mxu0 %v2270
      %v2396 = vpop.f32.mrb[0].mxu0
      %v2397 = vadd.f32 %v2296, %v2396
      %v2398 = vpop.f32.mrb[0].mxu0
      %v2399 = vpop.f32.mrb[0].mxu0
      %v2400 = vadd.f32 %v2296, %v2399
      %v2401 = vpop.f32.mrb[0].mxu0
      %2402 = vmatprep.mubr.bf16.mxu0 0
      %2403 = vmatmul.mubr.bf16.gmra.mrb[0].mxu0 %v2271
      %v2404 = vpop.f32.mrb[0].mxu0
      %v2405 = vadd.f32 %v2296, %v2404
      %v2406 = vpop.f32.mrb[0].mxu0
      %v2407 = vpop.f32.mrb[0].mxu0
      %v2408 = vadd.f32 %v2296, %v2407
      %v2409 = vpop.f32.mrb[0].mxu0
      %2410 = vmatprep.mubr.bf16.mxu0 0
      %2411 = vmatmul.mubr.bf16.gmra.mrb[0].mxu0 %v2272
      %v2412 = vpop.f32.mrb[0].mxu0
      %v2413 = vadd.f32 %v2296, %v2412
      %v2414 = vpop.f32.mrb[0].mxu0
      %v2415 = vpop.f32.mrb[0].mxu0
      %v2416 = vadd.f32 %v2296, %v2415
      %v2417 = vpop.f32.mrb[0].mxu0
      %2418 = vmatprep.mubr.bf16.mxu0 0
      %2419 = vmatmul.mubr.bf16.gmra.mrb[0].mxu0 %v2273
      %v2420 = vpop.f32.mrb[0].mxu0
      %v2421 = vadd.f32 %v2296, %v2420
      %v2422 = vpop.f32.mrb[0].mxu0
      %v2423 = vpop.f32.mrb[0].mxu0
      %v2424 = vadd.f32 %v2296, %v2423
      %v2425 = vpop.f32.mrb[0].mxu0
      %2426 = vmatprep.mubr.bf16.mxu0 0
      %2427 = vmatmul.mubr.bf16.gmra.mrb[0].mxu0 %v2274
      %v2428 = vpop.f32.mrb[0].mxu0
      %v2429 = vadd.f32 %v2296, %v2428
      %v2430 = vpop.f32.mrb[0].mxu0
      %v2431 = vpop.f32.mrb[0].mxu0
      %v2432 = vadd.f32 %v2296, %v2431
      %v2433 = vpop.f32.mrb[0].mxu0
      %2434 = vdwg.mxu0
      %v2435 = vsub.f32 %v2381, 0.3
      %v2436 = vsub.f32 %v2384, 0.3
      %v2437 = vsub.f32 %v2389, 0.3
      %v2438 = vsub.f32 %v2392, 0.3
      %v2439 = vsub.f32 %v2397, 0.3
      %v2440 = vsub.f32 %v2400, 0.3
      %v2441 = vsub.f32 %v2405, 0.3
      %v2442 = vsub.f32 %v2408, 0.3
      %v2443 = vsub.f32 %v2413, 0.3
      %v2444 = vsub.f32 %v2416, 0.3
      %v2445 = vsub.f32 %v2421, 0.3
      %v2446 = vsub.f32 %v2424, 0.3
      %v2447 = vsub.f32 %v2429, 0.3
      %v2448 = vsub.f32 %v2432, 0.3
      %v2449 = vmax.f32 %v2435, 0.0
      %v2450 = vmax.f32 %v2436, 0.0
      %v2451 = vmax.f32 %v2437, 0.0
      %v2452 = vmax.f32 %v2438, 0.0
      %v2453 = vmax.f32 %v2439, 0.0
      %v2454 = vmax.f32 %v2440, 0.0
      %v2455 = vmax.f32 %v2441, 0.0
      %v2456 = vmax.f32 %v2442, 0.0
      %v2457 = vmax.f32 %v2443, 0.0
      %v2458 = vmax.f32 %v2444, 0.0
      %v2459 = vmax.f32 %v2445, 0.0
      %v2460 = vmax.f32 %v2446, 0.0
      %v2461 = vmax.f32 %v2447, 0.0
      %v2462 = vmax.f32 %v2448, 0.0
      %v2463 = vsub.f32 %v2449, 0.2
      %v2464 = vsub.f32 %v2450, 0.2
      %v2465 = vsub.f32 %v2451, 0.2
      %v2466 = vsub.f32 %v2452, 0.2
      %v2467 = vsub.f32 %v2453, 0.2
      %v2468 = vsub.f32 %v2454, 0.2
      %v2469 = vsub.f32 %v2455, 0.2
      %v2470 = vsub.f32 %v2456, 0.2
      %v2471 = vsub.f32 %v2457, 0.2
      %v2472 = vsub.f32 %v2458, 0.2
      %v2473 = vsub.f32 %v2459, 0.2
      %v2474 = vsub.f32 %v2460, 0.2
      %v2475 = vsub.f32 %v2461, 0.2
      %v2476 = vsub.f32 %v2462, 0.2
      %v2477 = vmax.f32 %v2463, 0.0
      %v2478 = vmax.f32 %v2464, 0.0
      %v2479 = vmax.f32 %v2465, 0.0
      %v2480 = vmax.f32 %v2466, 0.0
      %v2481 = vmax.f32 %v2467, 0.0
      %v2482 = vmax.f32 %v2468, 0.0
      %v2483 = vmax.f32 %v2469, 0.0
      %v2484 = vmax.f32 %v2470, 0.0
      %v2485 = vmax.f32 %v2471, 0.0
      %v2486 = vmax.f32 %v2472, 0.0
      %v2487 = vmax.f32 %v2473, 0.0
      %v2488 = vmax.f32 %v2474, 0.0
      %v2489 = vmax.f32 %v2475, 0.0
      %v2490 = vmax.f32 %v2476, 0.0
      %vm2491 = vcmask 121856
      %2492 = vst.msk [vmem:[%s192] sm:$0xff] %vm2491, %v2477
      %2493 = vst.msk [vmem:[%s192 + $0x8] sm:$0xff] %vm2491, %v2478
      %2494 = vst.msk [vmem:[%s192 + $0x10] sm:$0xff] %vm2491, %v2479
      %2495 = vst.msk [vmem:[%s192 + $0x18] sm:$0xff] %vm2491, %v2480
      %2496 = vst.msk [vmem:[%s192 + $0x20] sm:$0xff] %vm2491, %v2481
      %2497 = vst.msk [vmem:[%s192 + $0x28] sm:$0xff] %vm2491, %v2482
      %2498 = vst.msk [vmem:[%s192 + $0x30] sm:$0xff] %vm2491, %v2483
      %2499 = vst.msk [vmem:[%s192 + $0x38] sm:$0xff] %vm2491, %v2484
      %2500 = vst.msk [vmem:[%s192 + $0x40] sm:$0xff] %vm2491, %v2485
      %2501 = vst.msk [vmem:[%s192 + $0x48] sm:$0xff] %vm2491, %v2486
      %2502 = vst.msk [vmem:[%s192 + $0x50] sm:$0xff] %vm2491, %v2487
      %2503 = vst.msk [vmem:[%s192 + $0x58] sm:$0xff] %vm2491, %v2488
      %2504 = vst.msk [vmem:[%s192 + $0x60] sm:$0xff] %vm2491, %v2489
      %2505 = vst.msk [vmem:[%s192 + $0x68] sm:$0xff] %vm2491, %v2490
      %s2506 = smul.u32 14, %s19
      %p2507 = scmp.lt.s32.totalorder %s18, 1
      %s2508 = scalar_select %p2507, %s18, 1
      %p2509 = scmp.lt.s32.totalorder %s2506, 27
      %s2510 = scalar_select %p2509, %s2506, 27
      %s2511 = smul.addr %s2508, 28
      %s2512 = sadd.s32 %s2510, %s2511
      %s2513 = smul.addr %s2512, 8
      %s2514 = scalar_lea.vmem %s3, %s2513
      // Predicated region
      $region33: #{tpu_custom_call.1} parent=31 // pred_check
        %p2515 = pneg %p114
      $region34: #{tpu_custom_call.1} parent=31 // pred_check_branch
        %2517 = sbr.rel (%p2515) target = $region36
      $region35: #{tpu_custom_call.1} parent=31 // pred_region
        %s2518 = smul.u32 14, %s19
      $region36: #{tpu_custom_call.1} parent=31 // pred_fallthru
        _
    $region32: #{tpu_custom_call.1} parent=5 // pred_fallthru
      _
    %p2519 = scmp.le.s32.totalorder 2, %s9
    // Predicated region
    $region37: #{tpu_custom_call.1} parent=5 // pred_check
      %p2520 = pneg %p2519
    $region38: #{tpu_custom_call.1} parent=5 // pred_check_branch
      %2522 = sbr.rel (%p2520) target = $region40
    $region39: #{tpu_custom_call.1} parent=5 // pred_region
      %s2523 = ssub.s32 %s9, 2
      // Predicated region
      $region41: #{tpu_custom_call.1} parent=39 // pred_check
        %p2524 = pneg %p120
      $region42: #{tpu_custom_call.1} parent=39 // pred_check_branch
        %2526 = sbr.rel (%p2524) target = $region44
      $region43: #{tpu_custom_call.1} parent=39 // pred_region
        %s2527 = smul.u32 14, %s21
        %p2528 = scmp.lt.s32.totalorder %s20, 1
        %s2529 = scalar_select %p2528, %s20, 1
        %p2530 = scmp.lt.s32.totalorder %s2527, 27
        %s2531 = scalar_select %p2530, %s2527, 27
        %s2532 = smul.addr %s2529, 28
        %s2533 = sadd.s32 %s2531, %s2532
        %s2534 = smul.addr %s2533, 8
        %s2535 = scalar_lea.vmem %s3, %s2534
      $region44: #{tpu_custom_call.1} parent=39 // pred_fallthru
        _
    $region40: #{tpu_custom_call.1} parent=5 // pred_fallthru
      _
  $region6: #{tpu_custom_call.1} parent=0 // loop_footer
    %s13 = sadd.s32 1, %s9
  $region7: #{tpu_custom_call.1} parent=0 // loop_footer_branch
    %8 = sbr.rel target = $region3
  $region8: #{tpu_custom_call.1} parent=0 // loop_exit
    _

</llo_original>
